<compile_context>
chip_gen: v5e
topology: v5e:2x2
jax: 0.10.0
libtpu: 0.0.40
codegen_flags: <defaults>
</compile_context>

<pallas_src>
import functools

import jax
import jax.numpy as jnp
from jax.experimental import pallas as pl
from jax.experimental.pallas import tpu as pltpu

_LANE = 128
_SUBLANE = 8


def _round_up(x, m):
    return ((x + m - 1) // m) * m


def _sigmoid(x):
    # Numerically stable sigmoid; tanh lowers to the EUP slot (no VALU divide).
    return 0.5 * (jnp.tanh(0.5 * x) + 1.0)


# ----------------------------------------------------------------------------
# Fused Pallas kernels (one micro-batch of MB rows per grid step)
# ----------------------------------------------------------------------------
def _fused_train_kernel(
    # data (per micro-batch blocks)
    x_ref, gt_ref, eps_ref, zp_ref,
    # weights (VMEM-resident across grid steps)
    w_enc, w_mulv, w_dec1, w_dec2, w_d1, w_d2, bias_ref,
    # outputs (per micro-batch blocks)
    x_tilde_ref, mulv_ref, feat_gt_ref, feat_xt_ref,
    cls_gt_ref, cls_xt_ref, cls_xp_ref,
    # scratch
    z_all_sc,
    *, mb, z_size, enc_hidden, dec_hidden, disc_hidden, img_flat,
):
    f32 = jnp.float32

    # Packed biases: one full-tile load, then cheap value slices (all lane-aligned).
    bias = bias_ref[...]
    b_enc = bias[0:1, 0:enc_hidden]
    b_mulv = bias[1:2, 0:2 * z_size]
    b_dec1 = bias[2:3, 0:dec_hidden]
    b_dec2 = bias[3:4, 0:img_flat]
    b_d1 = bias[4:5, 0:disc_hidden]
    b_d2 = bias[5:6, 0:_LANE]

    # --- cognitive encoder: relu(x @ W + b); fused (mu | logvar) head ----------
    h_enc = jnp.maximum(
        jnp.dot(x_ref[...], w_enc[...], preferred_element_type=f32) + b_enc, 0.0)
    mulv = jnp.dot(h_enc, w_mulv[...], preferred_element_type=f32) + b_mulv
    mulv_ref[...] = mulv                       # packed (MB, 2Z), lane-dense
    mu = mulv[:, :z_size]
    logvar = mulv[:, z_size:]

    # --- reparameterize: z = eps * exp(0.5 * logvar) + mu -----------------------
    z = eps_ref[...] * jnp.exp(0.5 * logvar) + mu

    # --- decoder on the stacked (2*MB, Z) slab [z ; z_p] -------------------------
    # mb is a multiple of 8 -> both stores are unmasked full-tile writes.
    z_all_sc[0:mb, :] = z
    z_all_sc[mb:2 * mb, :] = zp_ref[...]
    h_dec = jnp.maximum(
        jnp.dot(z_all_sc[...], w_dec1[...], preferred_element_type=f32) + b_dec1, 0.0)
    x_dec = jnp.tanh(
        jnp.dot(h_dec, w_dec2[...], preferred_element_type=f32) + b_dec2)
    x_tilde_ref[...] = x_dec[0:mb]             # 8-row-aligned value slice

    # --- discriminator fc1 on gt and on the decoded slab (no concat slab) -------
    feat_gt = jnp.maximum(
        jnp.dot(gt_ref[...], w_d1[...], preferred_element_type=f32) + b_d1, 0.0)
    feat_dec = jnp.maximum(
        jnp.dot(x_dec, w_d1[...], preferred_element_type=f32) + b_d1, 0.0)
    feat_gt_ref[...] = feat_gt                 # 'REC' features (originals)
    feat_xt_ref[...] = feat_dec[0:mb]          # 'REC' features (predictions)

    # --- discriminator fc2 + sigmoid ('GAN' scores; column 0 is the real score) -
    cls_gt_ref[...] = _sigmoid(
        jnp.dot(feat_gt, w_d2[...], preferred_element_type=f32) + b_d2)
    cls_dec = _sigmoid(
        jnp.dot(feat_dec, w_d2[...], preferred_element_type=f32) + b_d2)
    cls_xt_ref[...] = cls_dec[0:mb]
    cls_xp_ref[...] = cls_dec[mb:2 * mb]


def _fused_eval_kernel(
    x_ref, eps_ref,
    w_enc, w_mulv, w_dec1, w_dec2, bias_ref,
    x_tilde_ref,
    *, z_size, enc_hidden, dec_hidden, img_flat,
):
    f32 = jnp.float32
    bias = bias_ref[...]
    b_enc = bias[0:1, 0:enc_hidden]
    b_mulv = bias[1:2, 0:2 * z_size]
    b_dec1 = bias[2:3, 0:dec_hidden]
    b_dec2 = bias[3:4, 0:img_flat]

    h_enc = jnp.maximum(
        jnp.dot(x_ref[...], w_enc[...], preferred_element_type=f32) + b_enc, 0.0)
    mulv = jnp.dot(h_enc, w_mulv[...], preferred_element_type=f32) + b_mulv
    mu = mulv[:, :z_size]
    logvar = mulv[:, z_size:]
    # PyTorch eval path also applies reparameterize (noise passed in as eps).
    z = eps_ref[...] * jnp.exp(0.5 * logvar) + mu
    h_dec = jnp.maximum(
        jnp.dot(z, w_dec1[...], preferred_element_type=f32) + b_dec1, 0.0)
    x_tilde_ref[...] = jnp.tanh(
        jnp.dot(h_dec, w_dec2[...], preferred_element_type=f32) + b_dec2)


# ----------------------------------------------------------------------------
# Sub-network parameters (deterministic synthetic MLPs)
# ----------------------------------------------------------------------------
def _init_linear(key, fan_in, fan_out, pad_out=None):
    kw, kb = jax.random.split(key)
    scale = 1.0 / jnp.sqrt(jnp.float32(fan_in))
    w = jax.random.normal(kw, (fan_in, fan_out), jnp.float32) * scale
    b = jax.random.normal(kb, (fan_out,), jnp.float32) * 0.01
    if pad_out is not None and pad_out > fan_out:
        w = jnp.pad(w, ((0, 0), (0, pad_out - fan_out)))
        b = jnp.pad(b, (0, pad_out - fan_out))
    return w, b


def init_params(key, *, n_voxels, z_size, img_c, img_h, img_w,
                enc_hidden, dec_hidden, disc_hidden):
    img_flat = img_c * img_h * img_w
    keys = jax.random.split(key, 6)
    w_enc, b_enc = _init_linear(keys[0], n_voxels, enc_hidden)
    w_mulv, b_mulv = _init_linear(keys[1], enc_hidden, 2 * z_size)
    w_dec1, b_dec1 = _init_linear(keys[2], z_size, dec_hidden)
    w_dec2, b_dec2 = _init_linear(keys[3], dec_hidden, img_flat)
    w_d1, b_d1 = _init_linear(keys[4], img_flat, disc_hidden)
    # disc fc2 true width is 1; padded to 128 lanes (column 0 is the real score).
    w_d2, b_d2 = _init_linear(keys[5], disc_hidden, 1, pad_out=_LANE)

    # Pack all biases into one (8, max_width) array (single DMA descriptor).
    bias_width = _round_up(
        max(enc_hidden, 2 * z_size, dec_hidden, img_flat, disc_hidden, _LANE), _LANE)
    bias_pack = jnp.zeros((_SUBLANE, bias_width), jnp.float32)
    for i, b in enumerate([b_enc, b_mulv, b_dec1, b_dec2, b_d1, b_d2]):
        bias_pack = bias_pack.at[i, : b.shape[0]].set(b)

    return {
        "w_enc": w_enc, "w_mulv": w_mulv,
        "w_dec1": w_dec1, "w_dec2": w_dec2,
        "w_d1": w_d1, "w_d2": w_d2,
        "bias_pack": bias_pack,
        "img_shape": (img_c, img_h, img_w),
        "z_size": z_size,
        "n_voxels": n_voxels,
        "enc_hidden": enc_hidden,
        "dec_hidden": dec_hidden,
        "disc_hidden": disc_hidden,
    }


# ----------------------------------------------------------------------------
# VaeGanCognitive.forward  (mode='vae', teacher_net=None, stage=1)
# ----------------------------------------------------------------------------
def vae_gan_cognitive_forward(params, sample, eps, z_p, *, training=True,
                              micro_batch=8):
    """`eps` / `z_p` are the normal draws torch generates internally (passed in
    so the computation stays deterministic)."""
    x = sample["fmri"]                       # (B, V)
    gt_x = sample["image"]                   # (B, C, H, W)
    B = x.shape[0]
    c, h, w = params["img_shape"]
    img_flat = c * h * w
    Z = params["z_size"]
    V = params["n_voxels"]
    He = params["enc_hidden"]
    Hd = params["dec_hidden"]
    Hdisc = params["disc_hidden"]

    # Micro-batch size: multiple of the f32 sublane tile (8).  For real training
    # batches raise micro_batch (e.g. 128) to fill the MXU M dimension.
    MB = max(_SUBLANE, _round_up(micro_batch, _SUBLANE))
    B_pad = _round_up(max(B, 1), MB)
    num_mb = B_pad // MB

    def pad_rows(a):
        return jnp.pad(a, ((0, B_pad - B), (0, 0))) if B_pad != B else a

    x_pad = pad_rows(x)
    eps_pad = pad_rows(eps)

    train_weights = (params["w_enc"], params["w_mulv"], params["w_dec1"],
                     params["w_dec2"], params["w_d1"], params["w_d2"],
                     params["bias_pack"])

    # Explicit VMEM budget: weights (resident) + double-buffered per-block I/O
    # + scratch, with headroom.  Tiny today; re-derive before scaling image sizes.
    weight_bytes = 4 * sum(int(a.size) for a in train_weights)
    block_in_floats = MB * (V + img_flat + Z + Z)
    block_out_floats = MB * (img_flat + 2 * Z + 2 * Hdisc + 3 * _LANE)
    scratch_floats = 2 * MB * Z
    footprint = weight_bytes + 4 * (2 * (block_in_floats + block_out_floats)
                                    + scratch_floats)
    vmem_limit = min(int(footprint) + (4 << 20), 32 << 20)

    def const_spec(arr):
        return pl.BlockSpec(arr.shape, lambda i: (0, 0))

    if not training:
        eval_weights = (params["w_enc"], params["w_mulv"], params["w_dec1"],
                        params["w_dec2"], params["bias_pack"])
        flops = 2 * B_pad * (V * He + He * 2 * Z + Z * Hd + Hd * img_flat)
        trans = B_pad * (Z + img_flat)
        bytes_acc = 4 * (int(x_pad.size) + int(eps_pad.size)
                         + sum(int(a.size) for a in eval_weights)
                         + B_pad * img_flat)
        x_tilde_flat = pl.pallas_call(
            functools.partial(_fused_eval_kernel, z_size=Z, enc_hidden=He,
                              dec_hidden=Hd, img_flat=img_flat),
            out_shape=jax.ShapeDtypeStruct((B_pad, img_flat), jnp.float32),
            grid_spec=pltpu.PrefetchScalarGridSpec(
                num_scalar_prefetch=0,
                grid=(num_mb,),
                in_specs=[
                    pl.BlockSpec((MB, V), lambda i: (i, 0)),
                    pl.BlockSpec((MB, Z), lambda i: (i, 0)),
                ] + [const_spec(a) for a in eval_weights],
                out_specs=pl.BlockSpec((MB, img_flat), lambda i: (i, 0)),
            ),
            compiler_params=pltpu.CompilerParams(
                dimension_semantics=("parallel",),
                vmem_limit_bytes=vmem_limit),
            cost_estimate=pl.CostEstimate(
                flops=int(flops), transcendentals=int(trans),
                bytes_accessed=int(bytes_acc)),
        )(x_pad, eps_pad, *eval_weights)
        return x_tilde_flat[:B].reshape(B, c, h, w)

    # TODO(synk): stage-2 teacher_net distillation branch (visual teacher encoder)
    # and mode='wae' are not instantiated here (teacher_net=None, mode='vae'), so
    # gt_x passes through unchanged.
    gt_flat = pad_rows(gt_x.reshape(B, img_flat))
    zp_pad = pad_rows(z_p)

    flops = 2 * B_pad * (
        V * He + He * 2 * Z                 # encoder + fused mu|logvar head
        + 2 * (Z * Hd + Hd * img_flat)      # decoder on [z ; z_p]
        + 3 * img_flat * Hdisc              # disc fc1 (gt + x_tilde + x_p)
        + 3 * Hdisc * _LANE)                # disc fc2
    trans = B_pad * (Z + 2 * img_flat + 3 * _LANE)
    out_floats = B_pad * (img_flat + 2 * Z + 2 * Hdisc + 3 * _LANE)
    bytes_acc = 4 * (int(x_pad.size) + int(gt_flat.size) + int(eps_pad.size)
                     + int(zp_pad.size)
                     + sum(int(a.size) for a in train_weights) + out_floats)

    outs = pl.pallas_call(
        functools.partial(_fused_train_kernel, mb=MB, z_size=Z, enc_hidden=He,
                          dec_hidden=Hd, disc_hidden=Hdisc, img_flat=img_flat),
        out_shape=(
            jax.ShapeDtypeStruct((B_pad, img_flat), jnp.float32),   # x_tilde (flat)
            jax.ShapeDtypeStruct((B_pad, 2 * Z), jnp.float32),      # mu | logvar
            jax.ShapeDtypeStruct((B_pad, Hdisc), jnp.float32),      # 'REC' feats (gt)
            jax.ShapeDtypeStruct((B_pad, Hdisc), jnp.float32),      # 'REC' feats (x~)
            jax.ShapeDtypeStruct((B_pad, _LANE), jnp.float32),      # 'GAN' score gt
            jax.ShapeDtypeStruct((B_pad, _LANE), jnp.float32),      # 'GAN' score x~
            jax.ShapeDtypeStruct((B_pad, _LANE), jnp.float32),      # 'GAN' score x_p
        ),
        grid_spec=pltpu.PrefetchScalarGridSpec(
            num_scalar_prefetch=0,
            grid=(num_mb,),
            in_specs=[
                pl.BlockSpec((MB, V), lambda i: (i, 0)),
                pl.BlockSpec((MB, img_flat), lambda i: (i, 0)),
                pl.BlockSpec((MB, Z), lambda i: (i, 0)),
                pl.BlockSpec((MB, Z), lambda i: (i, 0)),
            ] + [const_spec(a) for a in train_weights],
            out_specs=(
                pl.BlockSpec((MB, img_flat), lambda i: (i, 0)),
                pl.BlockSpec((MB, 2 * Z), lambda i: (i, 0)),
                pl.BlockSpec((MB, Hdisc), lambda i: (i, 0)),
                pl.BlockSpec((MB, Hdisc), lambda i: (i, 0)),
                pl.BlockSpec((MB, _LANE), lambda i: (i, 0)),
                pl.BlockSpec((MB, _LANE), lambda i: (i, 0)),
                pl.BlockSpec((MB, _LANE), lambda i: (i, 0)),
            ),
            scratch_shapes=[pltpu.VMEM((2 * MB, Z), jnp.float32)],  # [z ; z_p] slab
        ),
        compiler_params=pltpu.CompilerParams(
            dimension_semantics=("parallel",),
            vmem_limit_bytes=vmem_limit),
        cost_estimate=pl.CostEstimate(
            flops=int(flops), transcendentals=int(trans),
            bytes_accessed=int(bytes_acc)),
    )(x_pad, gt_flat, eps_pad, zp_pad, *train_weights)

    x_tilde_flat, mulv, feat_gt, feat_xt, cls_gt, cls_xt, cls_xp = outs

    x_tilde = x_tilde_flat[:B].reshape(B, c, h, w)
    mus = mulv[:B, :Z]
    log_variances = mulv[:B, Z:]
    disc_layer = jnp.concatenate([feat_gt[:B], feat_xt[:B]], axis=0)    # (2B, Hdisc)
    disc_class = jnp.concatenate(
        [cls_gt[:B, :1], cls_xt[:B, :1], cls_xp[:B, :1]], axis=0)       # (3B, 1)
    return gt_x, x_tilde, disc_class, disc_layer, mus, log_variances


# ----------------------------------------------------------------------------
if __name__ == "__main__":
    # Small deterministic example shapes.
    B = 2              # batch
    N_VOXELS = 128     # fMRI feature dim
    Z_SIZE = 128       # latent size (module default z_size=128)
    C, H, W = 3, 16, 16

    key = jax.random.PRNGKey(0)
    k_par, k_fmri, k_img, k_eps, k_zp = jax.random.split(key, 5)

    params = init_params(
        k_par,
        n_voxels=N_VOXELS, z_size=Z_SIZE,
        img_c=C, img_h=H, img_w=W,
        enc_hidden=128, dec_hidden=128, disc_hidden=128,
    )

    sample = {
        "fmri": jax.random.normal(k_fmri, (B, N_VOXELS), jnp.float32),
        "image": jax.random.normal(k_img, (B, C, H, W), jnp.float32),
    }
    eps = jax.random.normal(k_eps, (B, Z_SIZE), jnp.float32)   # reparameterize noise
    z_p = jax.random.normal(k_zp, (B, Z_SIZE), jnp.float32)    # GAN prior samples

    # Training-mode forward (full VAE-GAN path, single fused kernel, 1-D grid).
    gt_x, x_tilde, disc_class, disc_layer, mus, log_variances = jax.block_until_ready(
        vae_gan_cognitive_forward(params, sample, eps, z_p, training=True)
    )
    assert gt_x.shape == (B, C, H, W)
    assert x_tilde.shape == (B, C, H, W)
    assert disc_class.shape == (3 * B, 1)
    assert disc_layer.shape == (2 * B, 128)
    assert mus.shape == (B, Z_SIZE) and log_variances.shape == (B, Z_SIZE)
    assert bool(jnp.all(jnp.isfinite(x_tilde)))
    assert bool(jnp.all((disc_class >= 0.0) & (disc_class <= 1.0)))

    # Eval-mode forward (returns x_tilde only, fused encoder+reparam+decoder).
    x_tilde_eval = jax.block_until_ready(
        vae_gan_cognitive_forward(params, sample, eps, z_p, training=False)
    )
    assert x_tilde_eval.shape == (B, C, H, W)
    assert bool(jnp.all(jnp.isfinite(x_tilde_eval)))

    print("KERNEL_OK")
</pallas_src>

<mosaic_0001>
module attributes {stable_mosaic.version = 11 : i64} {
  func.func @_fused_train_kernel(%arg0: i32, %arg1: memref<8x128xf32, #tpu.memory_space<vmem>>, %arg2: memref<8x768xf32, #tpu.memory_space<vmem>>, %arg3: memref<8x128xf32, #tpu.memory_space<vmem>>, %arg4: memref<8x128xf32, #tpu.memory_space<vmem>>, %arg5: memref<128x128xf32, #tpu.memory_space<vmem>>, %arg6: memref<128x256xf32, #tpu.memory_space<vmem>>, %arg7: memref<128x128xf32, #tpu.memory_space<vmem>>, %arg8: memref<128x768xf32, #tpu.memory_space<vmem>>, %arg9: memref<768x128xf32, #tpu.memory_space<vmem>>, %arg10: memref<128x128xf32, #tpu.memory_space<vmem>>, %arg11: memref<8x768xf32, #tpu.memory_space<vmem>>, %arg12: memref<8x768xf32, #tpu.memory_space<vmem>>, %arg13: memref<8x256xf32, #tpu.memory_space<vmem>>, %arg14: memref<8x128xf32, #tpu.memory_space<vmem>>, %arg15: memref<8x128xf32, #tpu.memory_space<vmem>>, %arg16: memref<8x128xf32, #tpu.memory_space<vmem>>, %arg17: memref<8x128xf32, #tpu.memory_space<vmem>>, %arg18: memref<8x128xf32, #tpu.memory_space<vmem>>, %arg19: memref<16x128xf32, #tpu.memory_space<vmem>>) attributes {dimension_semantics = [#tpu.dimension_semantics<parallel>], iteration_bounds = array<i64: 1>, scalar_prefetch = 0 : i64, scratch_operands = 1 : i64, tpu.core_type = #tpu.core_type<tc>, window_params = [{transform_indices = @transform_0, window_bounds = array<i64: 8, 128>}, {transform_indices = @transform_1, window_bounds = array<i64: 8, 768>}, {transform_indices = @transform_2, window_bounds = array<i64: 8, 128>}, {transform_indices = @transform_3, window_bounds = array<i64: 8, 128>}, {pipeline_mode = #tpu.pipeline_mode<synchronous>, transform_indices = @transform_4, window_bounds = array<i64: 128, 128>}, {pipeline_mode = #tpu.pipeline_mode<synchronous>, transform_indices = @transform_5, window_bounds = array<i64: 128, 256>}, {pipeline_mode = #tpu.pipeline_mode<synchronous>, transform_indices = @transform_6, window_bounds = array<i64: 128, 128>}, {pipeline_mode = #tpu.pipeline_mode<synchronous>, transform_indices = @transform_7, window_bounds = array<i64: 128, 768>}, {pipeline_mode = #tpu.pipeline_mode<synchronous>, transform_indices = @transform_8, window_bounds = array<i64: 768, 128>}, {pipeline_mode = #tpu.pipeline_mode<synchronous>, transform_indices = @transform_9, window_bounds = array<i64: 128, 128>}, {pipeline_mode = #tpu.pipeline_mode<synchronous>, transform_indices = @transform_10, window_bounds = array<i64: 8, 768>}, {transform_indices = @transform_11, window_bounds = array<i64: 8, 768>}, {transform_indices = @transform_12, window_bounds = array<i64: 8, 256>}, {transform_indices = @transform_13, window_bounds = array<i64: 8, 128>}, {transform_indices = @transform_14, window_bounds = array<i64: 8, 128>}, {transform_indices = @transform_15, window_bounds = array<i64: 8, 128>}, {transform_indices = @transform_16, window_bounds = array<i64: 8, 128>}, {transform_indices = @transform_17, window_bounds = array<i64: 8, 128>}]} {
    %c0 = arith.constant 0 : index
    %c0_0 = arith.constant 0 : index
    %0 = vector.load %arg11[%c0, %c0_0] : memref<8x768xf32, #tpu.memory_space<vmem>>, vector<8x768xf32>
    %1 = vector.extract_strided_slice %0 {offsets = [0, 0], sizes = [1, 128], strides = [1, 1]} : vector<8x768xf32> to vector<1x128xf32>
    %2 = vector.extract_strided_slice %0 {offsets = [1, 0], sizes = [1, 256], strides = [1, 1]} : vector<8x768xf32> to vector<1x256xf32>
    %3 = vector.extract_strided_slice %0 {offsets = [2, 0], sizes = [1, 128], strides = [1, 1]} : vector<8x768xf32> to vector<1x128xf32>
    %4 = vector.extract_strided_slice %0 {offsets = [3, 0], sizes = [1, 768], strides = [1, 1]} : vector<8x768xf32> to vector<1x768xf32>
    %5 = vector.extract_strided_slice %0 {offsets = [4, 0], sizes = [1, 128], strides = [1, 1]} : vector<8x768xf32> to vector<1x128xf32>
    %6 = vector.extract_strided_slice %0 {offsets = [5, 0], sizes = [1, 128], strides = [1, 1]} : vector<8x768xf32> to vector<1x128xf32>
    %c0_1 = arith.constant 0 : index
    %c0_2 = arith.constant 0 : index
    %7 = vector.load %arg1[%c0_1, %c0_2] : memref<8x128xf32, #tpu.memory_space<vmem>>, vector<8x128xf32>
    %c0_3 = arith.constant 0 : index
    %c0_4 = arith.constant 0 : index
    %8 = vector.load %arg5[%c0_3, %c0_4] : memref<128x128xf32, #tpu.memory_space<vmem>>, vector<128x128xf32>
    %cst = arith.constant dense<0.000000e+00> : vector<8x128xf32>
    %9 = tpu.matmul %7, %8, %cst {dimension_numbers = #tpu.dot_dimension_numbers<[1], [0], [0], [1], [0, 0, 1, 1], [], []>} : vector<8x128xf32>, vector<128x128xf32>, vector<8x128xf32> -> vector<8x128xf32>
    %10 = vector.broadcast %1 : vector<1x128xf32> to vector<8x128xf32>
    %11 = arith.addf %9, %10 : vector<8x128xf32>
    %cst_5 = arith.constant 0.000000e+00 : f32
    %12 = vector.broadcast %cst_5 : f32 to vector<8x128xf32>
    %13 = arith.maximumf %11, %12 : vector<8x128xf32>
    %c0_6 = arith.constant 0 : index
    %c0_7 = arith.constant 0 : index
    %14 = vector.load %arg6[%c0_6, %c0_7] : memref<128x256xf32, #tpu.memory_space<vmem>>, vector<128x256xf32>
    %cst_8 = arith.constant dense<0.000000e+00> : vector<8x256xf32>
    %15 = tpu.matmul %13, %14, %cst_8 {dimension_numbers = #tpu.dot_dimension_numbers<[1], [0], [0], [1], [0, 0, 1, 1], [], []>} : vector<8x128xf32>, vector<128x256xf32>, vector<8x256xf32> -> vector<8x256xf32>
    %16 = vector.broadcast %2 : vector<1x256xf32> to vector<8x256xf32>
    %17 = arith.addf %15, %16 : vector<8x256xf32>
    %c0_9 = arith.constant 0 : index
    %c0_10 = arith.constant 0 : index
    %18 = vector.load %arg13[%c0_9, %c0_10] : memref<8x256xf32, #tpu.memory_space<vmem>>, vector<8x256xf32>
    tpu.vector_store %arg13[%c0_9, %c0_10], %17 {strides = array<i32>} : memref<8x256xf32, #tpu.memory_space<vmem>>, vector<8x256xf32>,
    %19 = vector.extract_strided_slice %17 {offsets = [0, 0], sizes = [8, 128], strides = [1, 1]} : vector<8x256xf32> to vector<8x128xf32>
    %20 = vector.extract_strided_slice %17 {offsets = [0, 128], sizes = [8, 128], strides = [1, 1]} : vector<8x256xf32> to vector<8x128xf32>
    %c0_11 = arith.constant 0 : index
    %c0_12 = arith.constant 0 : index
    %21 = vector.load %arg3[%c0_11, %c0_12] : memref<8x128xf32, #tpu.memory_space<vmem>>, vector<8x128xf32>
    %cst_13 = arith.constant 5.000000e-01 : f32
    %22 = vector.broadcast %cst_13 : f32 to vector<8x128xf32>
    %23 = arith.mulf %22, %20 : vector<8x128xf32>
    %24 = math.exp %23 : vector<8x128xf32>
    %25 = arith.mulf %21, %24 : vector<8x128xf32>
    %26 = arith.addf %25, %19 : vector<8x128xf32>
    %c0_14 = arith.constant 0 : index
    %c0_15 = arith.constant 0 : index
    %27 = vector.load %arg19[%c0_14, %c0_15] : memref<16x128xf32, #tpu.memory_space<vmem>>, vector<8x128xf32>
    tpu.vector_store %arg19[%c0_14, %c0_15], %26 {strides = array<i32>} : memref<16x128xf32, #tpu.memory_space<vmem>>, vector<8x128xf32>,
    %c0_16 = arith.constant 0 : index
    %c0_17 = arith.constant 0 : index
    %28 = vector.load %arg4[%c0_16, %c0_17] : memref<8x128xf32, #tpu.memory_space<vmem>>, vector<8x128xf32>
    %c8 = arith.constant 8 : index
    %c0_18 = arith.constant 0 : index
    %29 = vector.load %arg19[%c8, %c0_18] : memref<16x128xf32, #tpu.memory_space<vmem>>, vector<8x128xf32>
    tpu.vector_store %arg19[%c8, %c0_18], %28 {strides = array<i32>} : memref<16x128xf32, #tpu.memory_space<vmem>>, vector<8x128xf32>,
    %c0_19 = arith.constant 0 : index
    %c0_20 = arith.constant 0 : index
    %30 = vector.load %arg19[%c0_19, %c0_20] : memref<16x128xf32, #tpu.memory_space<vmem>>, vector<16x128xf32>
    %c0_21 = arith.constant 0 : index
    %c0_22 = arith.constant 0 : index
    %31 = vector.load %arg7[%c0_21, %c0_22] : memref<128x128xf32, #tpu.memory_space<vmem>>, vector<128x128xf32>
    %cst_23 = arith.constant dense<0.000000e+00> : vector<16x128xf32>
    %32 = tpu.matmul %30, %31, %cst_23 {dimension_numbers = #tpu.dot_dimension_numbers<[1], [0], [0], [1], [0, 0, 1, 1], [], []>} : vector<16x128xf32>, vector<128x128xf32>, vector<16x128xf32> -> vector<16x128xf32>
    %33 = vector.broadcast %3 : vector<1x128xf32> to vector<16x128xf32>
    %34 = arith.addf %32, %33 : vector<16x128xf32>
    %cst_24 = arith.constant 0.000000e+00 : f32
    %35 = vector.broadcast %cst_24 : f32 to vector<16x128xf32>
    %36 = arith.maximumf %34, %35 : vector<16x128xf32>
    %c0_25 = arith.constant 0 : index
    %c0_26 = arith.constant 0 : index
    %37 = vector.load %arg8[%c0_25, %c0_26] : memref<128x768xf32, #tpu.memory_space<vmem>>, vector<128x768xf32>
    %cst_27 = arith.constant dense<0.000000e+00> : vector<16x768xf32>
    %38 = tpu.matmul %36, %37, %cst_27 {dimension_numbers = #tpu.dot_dimension_numbers<[1], [0], [0], [1], [0, 0, 1, 1], [], []>} : vector<16x128xf32>, vector<128x768xf32>, vector<16x768xf32> -> vector<16x768xf32>
    %39 = vector.broadcast %4 : vector<1x768xf32> to vector<16x768xf32>
    %40 = arith.addf %38, %39 : vector<16x768xf32>
    %41 = math.tanh %40 : vector<16x768xf32>
    %42 = vector.extract_strided_slice %41 {offsets = [0, 0], sizes = [8, 768], strides = [1, 1]} : vector<16x768xf32> to vector<8x768xf32>
    %c0_28 = arith.constant 0 : index
    %c0_29 = arith.constant 0 : index
    %43 = vector.load %arg12[%c0_28, %c0_29] : memref<8x768xf32, #tpu.memory_space<vmem>>, vector<8x768xf32>
    tpu.vector_store %arg12[%c0_28, %c0_29], %42 {strides = array<i32>} : memref<8x768xf32, #tpu.memory_space<vmem>>, vector<8x768xf32>,
    %c0_30 = arith.constant 0 : index
    %c0_31 = arith.constant 0 : index
    %44 = vector.load %arg2[%c0_30, %c0_31] : memref<8x768xf32, #tpu.memory_space<vmem>>, vector<8x768xf32>
    %c0_32 = arith.constant 0 : index
    %c0_33 = arith.constant 0 : index
    %45 = vector.load %arg9[%c0_32, %c0_33] : memref<768x128xf32, #tpu.memory_space<vmem>>, vector<768x128xf32>
    %cst_34 = arith.constant dense<0.000000e+00> : vector<8x128xf32>
    %46 = tpu.matmul %44, %45, %cst_34 {dimension_numbers = #tpu.dot_dimension_numbers<[1], [0], [0], [1], [0, 0, 1, 1], [], []>} : vector<8x768xf32>, vector<768x128xf32>, vector<8x128xf32> -> vector<8x128xf32>
    %47 = vector.broadcast %5 : vector<1x128xf32> to vector<8x128xf32>
    %48 = arith.addf %46, %47 : vector<8x128xf32>
    %cst_35 = arith.constant 0.000000e+00 : f32
    %49 = vector.broadcast %cst_35 : f32 to vector<8x128xf32>
    %50 = arith.maximumf %48, %49 : vector<8x128xf32>
    %c0_36 = arith.constant 0 : index
    %c0_37 = arith.constant 0 : index
    %51 = vector.load %arg9[%c0_36, %c0_37] : memref<768x128xf32, #tpu.memory_space<vmem>>, vector<768x128xf32>
    %cst_38 = arith.constant dense<0.000000e+00> : vector<16x128xf32>
    %52 = tpu.matmul %41, %51, %cst_38 {dimension_numbers = #tpu.dot_dimension_numbers<[1], [0], [0], [1], [0, 0, 1, 1], [], []>} : vector<16x768xf32>, vector<768x128xf32>, vector<16x128xf32> -> vector<16x128xf32>
    %53 = vector.broadcast %5 : vector<1x128xf32> to vector<16x128xf32>
    %54 = arith.addf %52, %53 : vector<16x128xf32>
    %cst_39 = arith.constant 0.000000e+00 : f32
    %55 = vector.broadcast %cst_39 : f32 to vector<16x128xf32>
    %56 = arith.maximumf %54, %55 : vector<16x128xf32>
    %c0_40 = arith.constant 0 : index
    %c0_41 = arith.constant 0 : index
    %57 = vector.load %arg14[%c0_40, %c0_41] : memref<8x128xf32, #tpu.memory_space<vmem>>, vector<8x128xf32>
    tpu.vector_store %arg14[%c0_40, %c0_41], %50 {strides = array<i32>} : memref<8x128xf32, #tpu.memory_space<vmem>>, vector<8x128xf32>,
    %58 = vector.extract_strided_slice %56 {offsets = [0, 0], sizes = [8, 128], strides = [1, 1]} : vector<16x128xf32> to vector<8x128xf32>
    %c0_42 = arith.constant 0 : index
    %c0_43 = arith.constant 0 : index
    %59 = vector.load %arg15[%c0_42, %c0_43] : memref<8x128xf32, #tpu.memory_space<vmem>>, vector<8x128xf32>
    tpu.vector_store %arg15[%c0_42, %c0_43], %58 {strides = array<i32>} : memref<8x128xf32, #tpu.memory_space<vmem>>, vector<8x128xf32>,
    %c0_44 = arith.constant 0 : index
    %c0_45 = arith.constant 0 : index
    %60 = vector.load %arg10[%c0_44, %c0_45] : memref<128x128xf32, #tpu.memory_space<vmem>>, vector<128x128xf32>
    %cst_46 = arith.constant dense<0.000000e+00> : vector<8x128xf32>
    %61 = tpu.matmul %50, %60, %cst_46 {dimension_numbers = #tpu.dot_dimension_numbers<[1], [0], [0], [1], [0, 0, 1, 1], [], []>} : vector<8x128xf32>, vector<128x128xf32>, vector<8x128xf32> -> vector<8x128xf32>
    %62 = vector.broadcast %6 : vector<1x128xf32> to vector<8x128xf32>
    %63 = arith.addf %61, %62 : vector<8x128xf32>
    %cst_47 = arith.constant 5.000000e-01 : f32
    %64 = vector.broadcast %cst_47 : f32 to vector<8x128xf32>
    %65 = arith.mulf %64, %63 : vector<8x128xf32>
    %66 = math.tanh %65 : vector<8x128xf32>
    %cst_48 = arith.constant 1.000000e+00 : f32
    %67 = vector.broadcast %cst_48 : f32 to vector<8x128xf32>
    %68 = arith.addf %66, %67 : vector<8x128xf32>
    %cst_49 = arith.constant 5.000000e-01 : f32
    %69 = vector.broadcast %cst_49 : f32 to vector<8x128xf32>
    %70 = arith.mulf %69, %68 : vector<8x128xf32>
    %c0_50 = arith.constant 0 : index
    %c0_51 = arith.constant 0 : index
    %71 = vector.load %arg16[%c0_50, %c0_51] : memref<8x128xf32, #tpu.memory_space<vmem>>, vector<8x128xf32>
    tpu.vector_store %arg16[%c0_50, %c0_51], %70 {strides = array<i32>} : memref<8x128xf32, #tpu.memory_space<vmem>>, vector<8x128xf32>,
    %c0_52 = arith.constant 0 : index
    %c0_53 = arith.constant 0 : index
    %72 = vector.load %arg10[%c0_52, %c0_53] : memref<128x128xf32, #tpu.memory_space<vmem>>, vector<128x128xf32>
    %cst_54 = arith.constant dense<0.000000e+00> : vector<16x128xf32>
    %73 = tpu.matmul %56, %72, %cst_54 {dimension_numbers = #tpu.dot_dimension_numbers<[1], [0], [0], [1], [0, 0, 1, 1], [], []>} : vector<16x128xf32>, vector<128x128xf32>, vector<16x128xf32> -> vector<16x128xf32>
    %74 = vector.broadcast %6 : vector<1x128xf32> to vector<16x128xf32>
    %75 = arith.addf %73, %74 : vector<16x128xf32>
    %cst_55 = arith.constant 5.000000e-01 : f32
    %76 = vector.broadcast %cst_55 : f32 to vector<16x128xf32>
    %77 = arith.mulf %76, %75 : vector<16x128xf32>
    %78 = math.tanh %77 : vector<16x128xf32>
    %cst_56 = arith.constant 1.000000e+00 : f32
    %79 = vector.broadcast %cst_56 : f32 to vector<16x128xf32>
    %80 = arith.addf %78, %79 : vector<16x128xf32>
    %cst_57 = arith.constant 5.000000e-01 : f32
    %81 = vector.broadcast %cst_57 : f32 to vector<16x128xf32>
    %82 = arith.mulf %81, %80 : vector<16x128xf32>
    %83 = vector.extract_strided_slice %82 {offsets = [0, 0], sizes = [8, 128], strides = [1, 1]} : vector<16x128xf32> to vector<8x128xf32>
    %c0_58 = arith.constant 0 : index
    %c0_59 = arith.constant 0 : index
    %84 = vector.load %arg17[%c0_58, %c0_59] : memref<8x128xf32, #tpu.memory_space<vmem>>, vector<8x128xf32>
    tpu.vector_store %arg17[%c0_58, %c0_59], %83 {strides = array<i32>} : memref<8x128xf32, #tpu.memory_space<vmem>>, vector<8x128xf32>,
    %85 = vector.extract_strided_slice %82 {offsets = [8, 0], sizes = [8, 128], strides = [1, 1]} : vector<16x128xf32> to vector<8x128xf32>
    %c0_60 = arith.constant 0 : index
    %c0_61 = arith.constant 0 : index
    %86 = vector.load %arg18[%c0_60, %c0_61] : memref<8x128xf32, #tpu.memory_space<vmem>>, vector<8x128xf32>
    tpu.vector_store %arg18[%c0_60, %c0_61], %85 {strides = array<i32>} : memref<8x128xf32, #tpu.memory_space<vmem>>, vector<8x128xf32>,
    return
  }
  func.func @transform_0(%arg0: i32) -> (i32, i32) {
    %c0_i32 = arith.constant 0 : i32
    %c0_i32_0 = arith.constant 0 : i32
    return %arg0, %c0_i32 : i32, i32
  }
  func.func @transform_1(%arg0: i32) -> (i32, i32) {
    %c0_i32 = arith.constant 0 : i32
    %c0_i32_0 = arith.constant 0 : i32
    return %arg0, %c0_i32 : i32, i32
  }
  func.func @transform_2(%arg0: i32) -> (i32, i32) {
    %c0_i32 = arith.constant 0 : i32
    %c0_i32_0 = arith.constant 0 : i32
    return %arg0, %c0_i32 : i32, i32
  }
  func.func @transform_3(%arg0: i32) -> (i32, i32) {
    %c0_i32 = arith.constant 0 : i32
    %c0_i32_0 = arith.constant 0 : i32
    return %arg0, %c0_i32 : i32, i32
  }
  func.func @transform_4(%arg0: i32) -> (i32, i32) {
    %c0_i32 = arith.constant 0 : i32
    %c0_i32_0 = arith.constant 0 : i32
    %c0_i32_1 = arith.constant 0 : i32
    return %c0_i32, %c0_i32_0 : i32, i32
  }
  func.func @transform_5(%arg0: i32) -> (i32, i32) {
    %c0_i32 = arith.constant 0 : i32
    %c0_i32_0 = arith.constant 0 : i32
    %c0_i32_1 = arith.constant 0 : i32
    return %c0_i32, %c0_i32_0 : i32, i32
  }
  func.func @transform_6(%arg0: i32) -> (i32, i32) {
    %c0_i32 = arith.constant 0 : i32
    %c0_i32_0 = arith.constant 0 : i32
    %c0_i32_1 = arith.constant 0 : i32
    return %c0_i32, %c0_i32_0 : i32, i32
  }
  func.func @transform_7(%arg0: i32) -> (i32, i32) {
    %c0_i32 = arith.constant 0 : i32
    %c0_i32_0 = arith.constant 0 : i32
    %c0_i32_1 = arith.constant 0 : i32
    return %c0_i32, %c0_i32_0 : i32, i32
  }
  func.func @transform_8(%arg0: i32) -> (i32, i32) {
    %c0_i32 = arith.constant 0 : i32
    %c0_i32_0 = arith.constant 0 : i32
    %c0_i32_1 = arith.constant 0 : i32
    return %c0_i32, %c0_i32_0 : i32, i32
  }
  func.func @transform_9(%arg0: i32) -> (i32, i32) {
    %c0_i32 = arith.constant 0 : i32
    %c0_i32_0 = arith.constant 0 : i32
    %c0_i32_1 = arith.constant 0 : i32
    return %c0_i32, %c0_i32_0 : i32, i32
  }
  func.func @transform_10(%arg0: i32) -> (i32, i32) {
    %c0_i32 = arith.constant 0 : i32
    %c0_i32_0 = arith.constant 0 : i32
    %c0_i32_1 = arith.constant 0 : i32
    return %c0_i32, %c0_i32_0 : i32, i32
  }
  func.func @transform_11(%arg0: i32) -> (i32, i32) {
    %c0_i32 = arith.constant 0 : i32
    %c0_i32_0 = arith.constant 0 : i32
    return %arg0, %c0_i32 : i32, i32
  }
  func.func @transform_12(%arg0: i32) -> (i32, i32) {
    %c0_i32 = arith.constant 0 : i32
    %c0_i32_0 = arith.constant 0 : i32
    return %arg0, %c0_i32 : i32, i32
  }
  func.func @transform_13(%arg0: i32) -> (i32, i32) {
    %c0_i32 = arith.constant 0 : i32
    %c0_i32_0 = arith.constant 0 : i32
    return %arg0, %c0_i32 : i32, i32
  }
  func.func @transform_14(%arg0: i32) -> (i32, i32) {
    %c0_i32 = arith.constant 0 : i32
    %c0_i32_0 = arith.constant 0 : i32
    return %arg0, %c0_i32 : i32, i32
  }
  func.func @transform_15(%arg0: i32) -> (i32, i32) {
    %c0_i32 = arith.constant 0 : i32
    %c0_i32_0 = arith.constant 0 : i32
    return %arg0, %c0_i32 : i32, i32
  }
  func.func @transform_16(%arg0: i32) -> (i32, i32) {
    %c0_i32 = arith.constant 0 : i32
    %c0_i32_0 = arith.constant 0 : i32
    return %arg0, %c0_i32 : i32, i32
  }
  func.func @transform_17(%arg0: i32) -> (i32, i32) {
    %c0_i32 = arith.constant 0 : i32
    %c0_i32_0 = arith.constant 0 : i32
    return %arg0, %c0_i32 : i32, i32
  }
}

</mosaic_0001>

<llo_original>
// kernel: tpu_custom_call.1
$region0: #{tpu_custom_call.1}
  #allocation0 [shape = 'u32[]', space=smem, size = 0x4, offset = 0x4, fixed_abs, tag = 'smem constant byte address 0x4 - core index']
  #allocation1 [shape = 'u32[72,128]{1,0:T(1,128)}', space=vmem, size = 0x9000, scoped, tag = 'internal scratch']
  #allocation2 [shape = 'f32[16,128]{1,0:T(8,128)}', space=vmem, size = 0x2000, scoped, tag = 'scratch operand']
  %s0 = inlined_call_operand.hbm [shape: f32[8,128], index: 0, kind: input, shape index: {}]
  %s1 = inlined_call_operand.hbm [shape: f32[8,768], index: 1, kind: input, shape index: {}]
  %s2 = inlined_call_operand.hbm [shape: f32[8,128], index: 2, kind: input, shape index: {}]
  %s3 = inlined_call_operand.hbm [shape: f32[8,128], index: 3, kind: input, shape index: {}]
  %s4 = inlined_call_operand.hbm [shape: f32[128,128], index: 4, kind: input, shape index: {}]
  %s5 = inlined_call_operand.hbm [shape: f32[128,256], index: 5, kind: input, shape index: {}]
  %s6 = inlined_call_operand.hbm [shape: f32[128,128], index: 6, kind: input, shape index: {}]
  %s7 = inlined_call_operand.hbm [shape: f32[128,768], index: 7, kind: input, shape index: {}]
  %s8 = inlined_call_operand.hbm [shape: f32[768,128], index: 8, kind: input, shape index: {}]
  %s9 = inlined_call_operand.hbm [shape: f32[128,128], index: 9, kind: input, shape index: {}]
  %s10 = inlined_call_operand.hbm [shape: f32[8,768], index: 10, kind: input, shape index: {}]
  %s11 = inlined_call_operand.hbm [shape: f32[8,768], index: 11, kind: output, shape index: {0}]
  %s12 = inlined_call_operand.hbm [shape: f32[8,256], index: 12, kind: output, shape index: {1}]
  %s13 = inlined_call_operand.hbm [shape: f32[8,128], index: 13, kind: output, shape index: {2}]
  %s14 = inlined_call_operand.hbm [shape: f32[8,128], index: 14, kind: output, shape index: {3}]
  %s15 = inlined_call_operand.hbm [shape: f32[8,128], index: 15, kind: output, shape index: {4}]
  %s16 = inlined_call_operand.hbm [shape: f32[8,128], index: 16, kind: output, shape index: {5}]
  %s17 = inlined_call_operand.hbm [shape: f32[8,128], index: 17, kind: output, shape index: {6}]
  %18 = xla_tuple %s11, %s12, %s13, %s14, %s15, %s16, %s17
  %s19 = sld [smem:[#allocation0]]
  $region146: #{tpu_custom_call.1} parent=0
    _
  %s21 = ssub.s32 1, %s19
  %s22 = scalar_select 0, %s21, %s19
  $region1: #{tpu_custom_call.1} parent=0
    #allocation3 [shape = 'u8[4096]{0}', space=vmem, size = 0x1000, scoped, tag = 'input window, operand 0, single buffered']
    #allocation4 [shape = 's32[1]{0}', space=sflag, size = 0x4, scoped, tag = 'scoped memory for tpu_custom_call.1']
    #allocation5 [shape = 's32[1]{0}', space=sflag, size = 0x4, scoped, tag = 'scoped memory for tpu_custom_call.1']
    #allocation6 [shape = 'u8[24576]{0}', space=vmem, size = 0x6000, scoped, tag = 'input window, operand 1, single buffered']
    #allocation7 [shape = 's32[1]{0}', space=sflag, size = 0x4, scoped, tag = 'scoped memory for tpu_custom_call.1']
    #allocation8 [shape = 'u8[4096]{0}', space=vmem, size = 0x1000, scoped, tag = 'input window, operand 2, single buffered']
    #allocation9 [shape = 'u8[4096]{0}', space=vmem, size = 0x1000, scoped, tag = 'input window, operand 3, single buffered']
    #allocation10 [shape = 's32[1]{0}', space=sflag, size = 0x4, scoped, tag = 'scoped memory for tpu_custom_call.1']
    #allocation11 [shape = 'u8[65536]{0}', space=vmem, size = 0x10000, scoped, tag = 'input window, operand 4, single buffered']
    #allocation12 [shape = 'u8[131072]{0}', space=vmem, size = 0x20000, scoped, tag = 'input window, operand 5, single buffered']
    #allocation13 [shape = 's32[1]{0}', space=sflag, size = 0x4, scoped, tag = 'scoped memory for tpu_custom_call.1']
    #allocation14 [shape = 'u8[65536]{0}', space=vmem, size = 0x10000, scoped, tag = 'input window, operand 6, single buffered']
    #allocation15 [shape = 'u8[393216]{0}', space=vmem, size = 0x60000, scoped, tag = 'input window, operand 7, single buffered']
    #allocation16 [shape = 's32[1]{0}', space=sflag, size = 0x4, scoped, tag = 'scoped memory for tpu_custom_call.1']
    #allocation17 [shape = 'u8[393216]{0}', space=vmem, size = 0x60000, scoped, tag = 'input window, operand 8, single buffered']
    #allocation18 [shape = 'u8[65536]{0}', space=vmem, size = 0x10000, scoped, tag = 'input window, operand 9, single buffered']
    #allocation19 [shape = 's32[1]{0}', space=sflag, size = 0x4, scoped, tag = 'scoped memory for tpu_custom_call.1']
    #allocation20 [shape = 'u8[24576]{0}', space=vmem, size = 0x6000, scoped, tag = 'input window, operand 10, single buffered']
    #allocation21 [shape = 'u8[24576]{0}', space=vmem, size = 0x6000, scoped, tag = 'output window, operand 0, single buffered']
    #allocation22 [shape = 'u8[8192]{0}', space=vmem, size = 0x2000, scoped, tag = 'output window, operand 1, single buffered']
    #allocation23 [shape = 's32[1]{0}', space=sflag, size = 0x4, scoped, tag = 'scoped memory for tpu_custom_call.1']
    #allocation24 [shape = 'u8[4096]{0}', space=vmem, size = 0x1000, scoped, tag = 'output window, operand 2, single buffered']
    #allocation25 [shape = 'u8[4096]{0}', space=vmem, size = 0x1000, scoped, tag = 'output window, operand 3, single buffered']
    #allocation26 [shape = 's32[1]{0}', space=sflag, size = 0x4, scoped, tag = 'scoped memory for tpu_custom_call.1']
    #allocation27 [shape = 'u8[4096]{0}', space=vmem, size = 0x1000, scoped, tag = 'output window, operand 4, single buffered']
    #allocation28 [shape = 'u8[4096]{0}', space=vmem, size = 0x1000, scoped, tag = 'output window, operand 5, single buffered']
    #allocation29 [shape = 's32[1]{0}', space=sflag, size = 0x4, scoped, tag = 'scoped memory for tpu_custom_call.1']
    #allocation30 [shape = 'u8[4096]{0}', space=vmem, size = 0x1000, scoped, tag = 'output window, operand 6, single buffered']
    %23 = vsyncpa [#allocation4], 0
    %24 = vsyncpa [#allocation7], 0
    %25 = vsyncpa [#allocation10], 0
    %26 = vsyncpa [#allocation13], 0
    %27 = vsyncpa [#allocation16], 0
    %28 = vsyncpa [#allocation19], 0
    %29 = vsyncpa [#allocation5], 0
    %30 = vsyncpa [#allocation23], 0
    %31 = vsyncpa [#allocation26], 0
    %32 = vsyncpa [#allocation29], 0
    // Predicated region
    $region2: #{tpu_custom_call.1} parent=1 // pred_check
      _
    $region3: #{tpu_custom_call.1} parent=1 // pred_check_branch
      %34 = sbr.rel (0) target = $region5
    $region4: #{tpu_custom_call.1} parent=1 // pred_region
      %36 = vsyncadd [#allocation4], 0
      %s38 = sshll.u32 %s0, 4
      %s39 = int_to_ptr.hbm [resolvable:$true] %s38
      %s40 = sshll.u32 [#allocation3], 4
      %s41 = int_to_ptr.vmem [resolvable:$true] %s40
      %43 = dma.hbm_to_vmem [thread:$0]  %s39, 128, %s41, [#allocation4]
    $region5: #{tpu_custom_call.1} parent=1 // pred_fallthru
      _
    // Predicated region
    $region6: #{tpu_custom_call.1} parent=1 // pred_check
      _
    $region7: #{tpu_custom_call.1} parent=1 // pred_check_branch
      %45 = sbr.rel (0) target = $region9
    $region8: #{tpu_custom_call.1} parent=1 // pred_region
      %47 = vsyncadd [#allocation7], 0
      %s49 = sshll.u32 %s1, 4
      %s50 = int_to_ptr.hbm [resolvable:$true] %s49
      %s51 = sshll.u32 [#allocation6], 4
      %s52 = int_to_ptr.vmem [resolvable:$true] %s51
      %54 = dma.hbm_to_vmem [thread:$0]  %s50, 768, %s52, [#allocation7]
    $region9: #{tpu_custom_call.1} parent=1 // pred_fallthru
      _
    // Predicated region
    $region10: #{tpu_custom_call.1} parent=1 // pred_check
      _
    $region11: #{tpu_custom_call.1} parent=1 // pred_check_branch
      %56 = sbr.rel (0) target = $region13
    $region12: #{tpu_custom_call.1} parent=1 // pred_region
      %58 = vsyncadd [#allocation7], 0
      %s60 = sshll.u32 %s2, 4
      %s61 = int_to_ptr.hbm [resolvable:$true] %s60
      %s62 = sshll.u32 [#allocation8], 4
      %s63 = int_to_ptr.vmem [resolvable:$true] %s62
      %65 = dma.hbm_to_vmem [thread:$0]  %s61, 128, %s63, [#allocation7]
    $region13: #{tpu_custom_call.1} parent=1 // pred_fallthru
      _
    // Predicated region
    $region14: #{tpu_custom_call.1} parent=1 // pred_check
      _
    $region15: #{tpu_custom_call.1} parent=1 // pred_check_branch
      %67 = sbr.rel (0) target = $region17
    $region16: #{tpu_custom_call.1} parent=1 // pred_region
      %69 = vsyncadd [#allocation10], 0
      %s71 = sshll.u32 %s3, 4
      %s72 = int_to_ptr.hbm [resolvable:$true] %s71
      %s73 = sshll.u32 [#allocation9], 4
      %s74 = int_to_ptr.vmem [resolvable:$true] %s73
      %76 = dma.hbm_to_vmem [thread:$0]  %s72, 128, %s74, [#allocation10]
    $region17: #{tpu_custom_call.1} parent=1 // pred_fallthru
      _
    // Predicated region
    $region18: #{tpu_custom_call.1} parent=1 // pred_check
      _
    $region19: #{tpu_custom_call.1} parent=1 // pred_check_branch
      %78 = sbr.rel (0) target = $region21
    $region20: #{tpu_custom_call.1} parent=1 // pred_region
      %80 = vsyncadd [#allocation10], 0
      %s81 = sshll.u32 %s4, 4
      %s82 = int_to_ptr.hbm [resolvable:$true] %s81
      %s83 = sshll.u32 [#allocation11], 4
      %s84 = int_to_ptr.vmem [resolvable:$true] %s83
      %89 = dma.hbm_to_vmem [thread:$0]  %s82, 2048, %s84, [#allocation10], 128, 128, 8
    $region21: #{tpu_custom_call.1} parent=1 // pred_fallthru
      _
    // Predicated region
    $region22: #{tpu_custom_call.1} parent=1 // pred_check
      _
    $region23: #{tpu_custom_call.1} parent=1 // pred_check_branch
      %91 = sbr.rel (0) target = $region25
    $region24: #{tpu_custom_call.1} parent=1 // pred_region
      %93 = vsyncadd [#allocation13], 0
      %s94 = sshll.u32 %s5, 4
      %s95 = int_to_ptr.hbm [resolvable:$true] %s94
      %s96 = sshll.u32 [#allocation12], 4
      %s97 = int_to_ptr.vmem [resolvable:$true] %s96
      %102 = dma.hbm_to_vmem [thread:$0]  %s95, 4096, %s97, [#allocation13], 256, 256, 16
    $region25: #{tpu_custom_call.1} parent=1 // pred_fallthru
      _
    // Predicated region
    $region26: #{tpu_custom_call.1} parent=1 // pred_check
      _
    $region27: #{tpu_custom_call.1} parent=1 // pred_check_branch
      %104 = sbr.rel (0) target = $region29
    $region28: #{tpu_custom_call.1} parent=1 // pred_region
      %106 = vsyncadd [#allocation13], 0
      %s107 = sshll.u32 %s6, 4
      %s108 = int_to_ptr.hbm [resolvable:$true] %s107
      %s109 = sshll.u32 [#allocation14], 4
      %s110 = int_to_ptr.vmem [resolvable:$true] %s109
      %115 = dma.hbm_to_vmem [thread:$0]  %s108, 2048, %s110, [#allocation13], 128, 128, 8
    $region29: #{tpu_custom_call.1} parent=1 // pred_fallthru
      _
    // Predicated region
    $region30: #{tpu_custom_call.1} parent=1 // pred_check
      _
    $region31: #{tpu_custom_call.1} parent=1 // pred_check_branch
      %117 = sbr.rel (0) target = $region33
    $region32: #{tpu_custom_call.1} parent=1 // pred_region
      %119 = vsyncadd [#allocation16], 0
      %s120 = sshll.u32 %s7, 4
      %s121 = int_to_ptr.hbm [resolvable:$true] %s120
      %s122 = sshll.u32 [#allocation15], 4
      %s123 = int_to_ptr.vmem [resolvable:$true] %s122
      %128 = dma.hbm_to_vmem [thread:$0]  %s121, 12288, %s123, [#allocation16], 768, 768, 48
    $region33: #{tpu_custom_call.1} parent=1 // pred_fallthru
      _
    // Predicated region
    $region34: #{tpu_custom_call.1} parent=1 // pred_check
      _
    $region35: #{tpu_custom_call.1} parent=1 // pred_check_branch
      %130 = sbr.rel (0) target = $region37
    $region36: #{tpu_custom_call.1} parent=1 // pred_region
      %132 = vsyncadd [#allocation16], 0
      %s133 = sshll.u32 %s8, 4
      %s134 = int_to_ptr.hbm [resolvable:$true] %s133
      %s135 = sshll.u32 [#allocation17], 4
      %s136 = int_to_ptr.vmem [resolvable:$true] %s135
      %141 = dma.hbm_to_vmem [thread:$0]  %s134, 12288, %s136, [#allocation16], 128, 128, 8
    $region37: #{tpu_custom_call.1} parent=1 // pred_fallthru
      _
    // Predicated region
    $region38: #{tpu_custom_call.1} parent=1 // pred_check
      _
    $region39: #{tpu_custom_call.1} parent=1 // pred_check_branch
      %143 = sbr.rel (0) target = $region41
    $region40: #{tpu_custom_call.1} parent=1 // pred_region
      %145 = vsyncadd [#allocation19], 0
      %s146 = sshll.u32 %s9, 4
      %s147 = int_to_ptr.hbm [resolvable:$true] %s146
      %s148 = sshll.u32 [#allocation18], 4
      %s149 = int_to_ptr.vmem [resolvable:$true] %s148
      %154 = dma.hbm_to_vmem [thread:$0]  %s147, 2048, %s149, [#allocation19], 128, 128, 8
    $region41: #{tpu_custom_call.1} parent=1 // pred_fallthru
      _
    // Predicated region
    $region42: #{tpu_custom_call.1} parent=1 // pred_check
      _
    $region43: #{tpu_custom_call.1} parent=1 // pred_check_branch
      %156 = sbr.rel (0) target = $region45
    $region44: #{tpu_custom_call.1} parent=1 // pred_region
      %158 = vsyncadd [#allocation19], 0
      %s160 = sshll.u32 %s10, 4
      %s161 = int_to_ptr.hbm [resolvable:$true] %s160
      %s162 = sshll.u32 [#allocation20], 4
      %s163 = int_to_ptr.vmem [resolvable:$true] %s162
      %165 = dma.hbm_to_vmem [thread:$0]  %s161, 768, %s163, [#allocation19]
    $region45: #{tpu_custom_call.1} parent=1 // pred_fallthru
      _
    // Predicated region
    $region46: #{tpu_custom_call.1} parent=1 // pred_check
      _
    $region47: #{tpu_custom_call.1} parent=1 // pred_check_branch
      %167 = sbr.rel (0) target = $region49
    $region48: #{tpu_custom_call.1} parent=1 // pred_region
      %169 = dma.done [#allocation4], 128
    $region49: #{tpu_custom_call.1} parent=1 // pred_fallthru
      _
    // Predicated region
    $region50: #{tpu_custom_call.1} parent=1 // pred_check
      _
    $region51: #{tpu_custom_call.1} parent=1 // pred_check_branch
      %171 = sbr.rel (0) target = $region53
    $region52: #{tpu_custom_call.1} parent=1 // pred_region
      %173 = dma.done [#allocation7], 768
    $region53: #{tpu_custom_call.1} parent=1 // pred_fallthru
      _
    // Predicated region
    $region54: #{tpu_custom_call.1} parent=1 // pred_check
      _
    $region55: #{tpu_custom_call.1} parent=1 // pred_check_branch
      %175 = sbr.rel (0) target = $region57
    $region56: #{tpu_custom_call.1} parent=1 // pred_region
      %177 = dma.done [#allocation7], 128
    $region57: #{tpu_custom_call.1} parent=1 // pred_fallthru
      _
    // Predicated region
    $region58: #{tpu_custom_call.1} parent=1 // pred_check
      _
    $region59: #{tpu_custom_call.1} parent=1 // pred_check_branch
      %179 = sbr.rel (0) target = $region61
    $region60: #{tpu_custom_call.1} parent=1 // pred_region
      %181 = dma.done [#allocation10], 128
    $region61: #{tpu_custom_call.1} parent=1 // pred_fallthru
      _
    // Predicated region
    $region62: #{tpu_custom_call.1} parent=1 // pred_check
      _
    $region63: #{tpu_custom_call.1} parent=1 // pred_check_branch
      %183 = sbr.rel (0) target = $region65
    $region64: #{tpu_custom_call.1} parent=1 // pred_region
      %185 = dma.done [#allocation10], 2048
    $region65: #{tpu_custom_call.1} parent=1 // pred_fallthru
      _
    // Predicated region
    $region66: #{tpu_custom_call.1} parent=1 // pred_check
      _
    $region67: #{tpu_custom_call.1} parent=1 // pred_check_branch
      %187 = sbr.rel (0) target = $region69
    $region68: #{tpu_custom_call.1} parent=1 // pred_region
      %189 = dma.done [#allocation13], 4096
    $region69: #{tpu_custom_call.1} parent=1 // pred_fallthru
      _
    // Predicated region
    $region70: #{tpu_custom_call.1} parent=1 // pred_check
      _
    $region71: #{tpu_custom_call.1} parent=1 // pred_check_branch
      %191 = sbr.rel (0) target = $region73
    $region72: #{tpu_custom_call.1} parent=1 // pred_region
      %193 = dma.done [#allocation13], 2048
    $region73: #{tpu_custom_call.1} parent=1 // pred_fallthru
      _
    // Predicated region
    $region74: #{tpu_custom_call.1} parent=1 // pred_check
      _
    $region75: #{tpu_custom_call.1} parent=1 // pred_check_branch
      %195 = sbr.rel (0) target = $region77
    $region76: #{tpu_custom_call.1} parent=1 // pred_region
      %197 = dma.done [#allocation16], 12288
    $region77: #{tpu_custom_call.1} parent=1 // pred_fallthru
      _
    // Predicated region
    $region78: #{tpu_custom_call.1} parent=1 // pred_check
      _
    $region79: #{tpu_custom_call.1} parent=1 // pred_check_branch
      %199 = sbr.rel (0) target = $region81
    $region80: #{tpu_custom_call.1} parent=1 // pred_region
      %201 = dma.done [#allocation16], 12288
    $region81: #{tpu_custom_call.1} parent=1 // pred_fallthru
      _
    // Predicated region
    $region82: #{tpu_custom_call.1} parent=1 // pred_check
      _
    $region83: #{tpu_custom_call.1} parent=1 // pred_check_branch
      %203 = sbr.rel (0) target = $region85
    $region84: #{tpu_custom_call.1} parent=1 // pred_region
      %205 = dma.done [#allocation19], 2048
    $region85: #{tpu_custom_call.1} parent=1 // pred_fallthru
      _
    // Predicated region
    $region86: #{tpu_custom_call.1} parent=1 // pred_check
      _
    $region87: #{tpu_custom_call.1} parent=1 // pred_check_branch
      %207 = sbr.rel (0) target = $region89
    $region88: #{tpu_custom_call.1} parent=1 // pred_region
      %209 = dma.done [#allocation19], 768
    $region89: #{tpu_custom_call.1} parent=1 // pred_fallthru
      _
    %v210 = vld [vmem:[#allocation20] sm:$0xff]
    %v211 = vld [vmem:[#allocation20 + $0x8] sm:$0xff]
    %v212 = vld [vmem:[#allocation20 + $0x10] sm:$0xff]
    %v213 = vld [vmem:[#allocation20 + $0x18] sm:$0xff]
    %v214 = vld [vmem:[#allocation20 + $0x20] sm:$0xff]
    %v215 = vld [vmem:[#allocation20 + $0x28] sm:$0xff]
    %v216 = vld [vmem:[#allocation3] sm:$0xff]
    %v217 = vld [vmem:[#allocation11] sm:$0xff]
    %v218 = vld [vmem:[#allocation11 + $0x8] sm:$0xff]
    %v219 = vld [vmem:[#allocation11 + $0x10] sm:$0xff]
    %v220 = vld [vmem:[#allocation11 + $0x18] sm:$0xff]
    %v221 = vld [vmem:[#allocation11 + $0x20] sm:$0xff]
    %v222 = vld [vmem:[#allocation11 + $0x28] sm:$0xff]
    %v223 = vld [vmem:[#allocation11 + $0x30] sm:$0xff]
    %v224 = vld [vmem:[#allocation11 + $0x38] sm:$0xff]
    %v225 = vld [vmem:[#allocation11 + $0x40] sm:$0xff]
    %v226 = vld [vmem:[#allocation11 + $0x48] sm:$0xff]
    %v227 = vld [vmem:[#allocation11 + $0x50] sm:$0xff]
    %v228 = vld [vmem:[#allocation11 + $0x58] sm:$0xff]
    %v229 = vld [vmem:[#allocation11 + $0x60] sm:$0xff]
    %v230 = vld [vmem:[#allocation11 + $0x68] sm:$0xff]
    %v231 = vld [vmem:[#allocation11 + $0x70] sm:$0xff]
    %v232 = vld [vmem:[#allocation11 + $0x78] sm:$0xff]
    %v233 = vperm.slane %v210, 0
    %234 = vmatpush.msra.mxu0 %v232
    %235 = vmatpush.msra.mxu0 %v231
    %236 = vmatpush.msra.mxu0 %v230
    %237 = vmatpush.msra.mxu0 %v229
    %238 = vmatpush.msra.mxu0 %v228
    %239 = vmatpush.msra.mxu0 %v227
    %240 = vmatpush.msra.mxu0 %v226
    %241 = vmatpush.msra.mxu0 %v225
    %242 = vmatpush.msra.mxu0 %v224
    %243 = vmatpush.msra.mxu0 %v223
    %244 = vmatpush.msra.mxu0 %v222
    %245 = vmatpush.msra.mxu0 %v221
    %246 = vmatpush.msra.mxu0 %v220
    %247 = vmatpush.msra.mxu0 %v219
    %248 = vmatpush.msra.mxu0 %v218
    %249 = vmatpush.msra.mxu0 %v217
    %250 = vmatmul.f32.gmra.mxu0 %v216
    %v251 = vpop.f32.mrf.mxu0
    %v252 = vadd.f32 %v233, %v251
    %253 = vdwg.mxu0
    %v254 = vmax.f32 %v252, 0.0
    %v255 = vld [vmem:[#allocation12] sm:$0xff]
    %v256 = vld [vmem:[#allocation12 + $0x8] sm:$0xff]
    %v257 = vld [vmem:[#allocation12 + $0x10] sm:$0xff]
    %v258 = vld [vmem:[#allocation12 + $0x18] sm:$0xff]
    %v259 = vld [vmem:[#allocation12 + $0x20] sm:$0xff]
    %v260 = vld [vmem:[#allocation12 + $0x28] sm:$0xff]
    %v261 = vld [vmem:[#allocation12 + $0x30] sm:$0xff]
    %v262 = vld [vmem:[#allocation12 + $0x38] sm:$0xff]
    %v263 = vld [vmem:[#allocation12 + $0x40] sm:$0xff]
    %v264 = vld [vmem:[#allocation12 + $0x48] sm:$0xff]
    %v265 = vld [vmem:[#allocation12 + $0x50] sm:$0xff]
    %v266 = vld [vmem:[#allocation12 + $0x58] sm:$0xff]
    %v267 = vld [vmem:[#allocation12 + $0x60] sm:$0xff]
    %v268 = vld [vmem:[#allocation12 + $0x68] sm:$0xff]
    %v269 = vld [vmem:[#allocation12 + $0x70] sm:$0xff]
    %v270 = vld [vmem:[#allocation12 + $0x78] sm:$0xff]
    %v271 = vld [vmem:[#allocation12 + $0x80] sm:$0xff]
    %v272 = vld [vmem:[#allocation12 + $0x88] sm:$0xff]
    %v273 = vld [vmem:[#allocation12 + $0x90] sm:$0xff]
    %v274 = vld [vmem:[#allocation12 + $0x98] sm:$0xff]
    %v275 = vld [vmem:[#allocation12 + $0xa0] sm:$0xff]
    %v276 = vld [vmem:[#allocation12 + $0xa8] sm:$0xff]
    %v277 = vld [vmem:[#allocation12 + $0xb0] sm:$0xff]
    %v278 = vld [vmem:[#allocation12 + $0xb8] sm:$0xff]
    %v279 = vld [vmem:[#allocation12 + $0xc0] sm:$0xff]
    %v280 = vld [vmem:[#allocation12 + $0xc8] sm:$0xff]
    %v281 = vld [vmem:[#allocation12 + $0xd0] sm:$0xff]
    %v282 = vld [vmem:[#allocation12 + $0xd8] sm:$0xff]
    %v283 = vld [vmem:[#allocation12 + $0xe0] sm:$0xff]
    %v284 = vld [vmem:[#allocation12 + $0xe8] sm:$0xff]
    %v285 = vld [vmem:[#allocation12 + $0xf0] sm:$0xff]
    %v286 = vld [vmem:[#allocation12 + $0xf8] sm:$0xff]
    %v287 = vperm.slane %v210, 1
    %v288 = vperm.slane %v211, 1
    %289 = vmatpush.msra.mxu0 %v285
    %290 = vmatpush.msra.mxu0 %v283
    %291 = vmatpush.msra.mxu0 %v281
    %292 = vmatpush.msra.mxu0 %v279
    %293 = vmatpush.msra.mxu0 %v277
    %294 = vmatpush.msra.mxu0 %v275
    %295 = vmatpush.msra.mxu0 %v273
    %296 = vmatpush.msra.mxu0 %v271
    %297 = vmatpush.msra.mxu0 %v269
    %298 = vmatpush.msra.mxu0 %v267
    %299 = vmatpush.msra.mxu0 %v265
    %300 = vmatpush.msra.mxu0 %v263
    %301 = vmatpush.msra.mxu0 %v261
    %302 = vmatpush.msra.mxu0 %v259
    %303 = vmatpush.msra.mxu0 %v257
    %304 = vmatpush.msra.mxu0 %v255
    %305 = vmatmul.f32.gmra.mxu0 %v254
    %v306 = vpop.f32.mrf.mxu0
    %v307 = vadd.f32 %v287, %v306
    %308 = vdwg.mxu0
    %309 = vmatpush.msra.mxu0 %v286
    %310 = vmatpush.msra.mxu0 %v284
    %311 = vmatpush.msra.mxu0 %v282
    %312 = vmatpush.msra.mxu0 %v280
    %313 = vmatpush.msra.mxu0 %v278
    %314 = vmatpush.msra.mxu0 %v276
    %315 = vmatpush.msra.mxu0 %v274
    %316 = vmatpush.msra.mxu0 %v272
    %317 = vmatpush.msra.mxu0 %v270
    %318 = vmatpush.msra.mxu0 %v268
    %319 = vmatpush.msra.mxu0 %v266
    %320 = vmatpush.msra.mxu0 %v264
    %321 = vmatpush.msra.mxu0 %v262
    %322 = vmatpush.msra.mxu0 %v260
    %323 = vmatpush.msra.mxu0 %v258
    %324 = vmatpush.msra.mxu0 %v256
    %325 = vmatmul.f32.gmra.mxu0 %v254
    %v326 = vpop.f32.mrf.mxu0
    %v327 = vadd.f32 %v288, %v326
    %328 = vdwg.mxu0
    %329 = vst [vmem:[#allocation22] sm:$0xff] %v307
    %330 = vst [vmem:[#allocation22 + $0x8] sm:$0xff] %v327
    %v331 = vld [vmem:[#allocation8] sm:$0xff]
    %v332 = vmul.f32 %v327, 0.5
    %v333 = vmul.f32 %v332, 1.442695
    %v334 = vpow.pop %v333
    %v335 = vmul.f32 %v331, %v334
    %v336 = vadd.f32 %v335, %v307
    %337 = vst [vmem:[#allocation2] sm:$0xff] %v336
    %v338 = vld [vmem:[#allocation9] sm:$0xff]
    %339 = vst [vmem:[#allocation2 + $0x8] sm:$0xff] %v338
    %v340 = vld [vmem:[#allocation2] sm:$0xff]
    %v341 = vld [vmem:[#allocation2 + $0x8] sm:$0xff]
    %v342 = vld [vmem:[#allocation14] sm:$0xff]
    %v343 = vld [vmem:[#allocation14 + $0x8] sm:$0xff]
    %v344 = vld [vmem:[#allocation14 + $0x10] sm:$0xff]
    %v345 = vld [vmem:[#allocation14 + $0x18] sm:$0xff]
    %v346 = vld [vmem:[#allocation14 + $0x20] sm:$0xff]
    %v347 = vld [vmem:[#allocation14 + $0x28] sm:$0xff]
    %v348 = vld [vmem:[#allocation14 + $0x30] sm:$0xff]
    %v349 = vld [vmem:[#allocation14 + $0x38] sm:$0xff]
    %v350 = vld [vmem:[#allocation14 + $0x40] sm:$0xff]
    %v351 = vld [vmem:[#allocation14 + $0x48] sm:$0xff]
    %v352 = vld [vmem:[#allocation14 + $0x50] sm:$0xff]
    %v353 = vld [vmem:[#allocation14 + $0x58] sm:$0xff]
    %v354 = vld [vmem:[#allocation14 + $0x60] sm:$0xff]
    %v355 = vld [vmem:[#allocation14 + $0x68] sm:$0xff]
    %v356 = vld [vmem:[#allocation14 + $0x70] sm:$0xff]
    %v357 = vld [vmem:[#allocation14 + $0x78] sm:$0xff]
    %v358 = vperm.slane %v210, 2
    %359 = vmatpush.msra.mxu0 %v357
    %360 = vmatpush.msra.mxu0 %v356
    %361 = vmatpush.msra.mxu0 %v355
    %362 = vmatpush.msra.mxu0 %v354
    %363 = vmatpush.msra.mxu0 %v353
    %364 = vmatpush.msra.mxu0 %v352
    %365 = vmatpush.msra.mxu0 %v351
    %366 = vmatpush.msra.mxu0 %v350
    %367 = vmatpush.msra.mxu0 %v349
    %368 = vmatpush.msra.mxu0 %v348
    %369 = vmatpush.msra.mxu0 %v347
    %370 = vmatpush.msra.mxu0 %v346
    %371 = vmatpush.msra.mxu0 %v345
    %372 = vmatpush.msra.mxu0 %v344
    %373 = vmatpush.msra.mxu0 %v343
    %374 = vmatpush.msra.mxu0 %v342
    %375 = vmatmul.f32.gmra.mxu0 %v340
    %v376 = vpop.f32.mrf.mxu0
    %v377 = vadd.f32 %v358, %v376
    %378 = vmatmul.f32.gmra.mxu0 %v341
    %v379 = vpop.f32.mrf.mxu0
    %v380 = vadd.f32 %v358, %v379
    %381 = vdwg.mxu0
    %v382 = vmax.f32 %v377, 0.0
    %v383 = vmax.f32 %v380, 0.0
    %v384 = vld [vmem:[#allocation15] sm:$0xff]
    %v385 = vld [vmem:[#allocation15 + $0x8] sm:$0xff]
    %v386 = vld [vmem:[#allocation15 + $0x10] sm:$0xff]
    %v387 = vld [vmem:[#allocation15 + $0x18] sm:$0xff]
    %v388 = vld [vmem:[#allocation15 + $0x20] sm:$0xff]
    %v389 = vld [vmem:[#allocation15 + $0x28] sm:$0xff]
    %v390 = vld [vmem:[#allocation15 + $0x30] sm:$0xff]
    %v391 = vld [vmem:[#allocation15 + $0x38] sm:$0xff]
    %v392 = vld [vmem:[#allocation15 + $0x40] sm:$0xff]
    %v393 = vld [vmem:[#allocation15 + $0x48] sm:$0xff]
    %v394 = vld [vmem:[#allocation15 + $0x50] sm:$0xff]
    %v395 = vld [vmem:[#allocation15 + $0x58] sm:$0xff]
    %v396 = vld [vmem:[#allocation15 + $0x60] sm:$0xff]
    %v397 = vld [vmem:[#allocation15 + $0x68] sm:$0xff]
    %v398 = vld [vmem:[#allocation15 + $0x70] sm:$0xff]
    %v399 = vld [vmem:[#allocation15 + $0x78] sm:$0xff]
    %v400 = vld [vmem:[#allocation15 + $0x80] sm:$0xff]
    %v401 = vld [vmem:[#allocation15 + $0x88] sm:$0xff]
    %v402 = vld [vmem:[#allocation15 + $0x90] sm:$0xff]
    %v403 = vld [vmem:[#allocation15 + $0x98] sm:$0xff]
    %v404 = vld [vmem:[#allocation15 + $0xa0] sm:$0xff]
    %v405 = vld [vmem:[#allocation15 + $0xa8] sm:$0xff]
    %v406 = vld [vmem:[#allocation15 + $0xb0] sm:$0xff]
    %v407 = vld [vmem:[#allocation15 + $0xb8] sm:$0xff]
    %v408 = vld [vmem:[#allocation15 + $0xc0] sm:$0xff]
    %v409 = vld [vmem:[#allocation15 + $0xc8] sm:$0xff]
    %v410 = vld [vmem:[#allocation15 + $0xd0] sm:$0xff]
    %v411 = vld [vmem:[#allocation15 + $0xd8] sm:$0xff]
    %v412 = vld [vmem:[#allocation15 + $0xe0] sm:$0xff]
    %v413 = vld [vmem:[#allocation15 + $0xe8] sm:$0xff]
    %v414 = vld [vmem:[#allocation15 + $0xf0] sm:$0xff]
    %v415 = vld [vmem:[#allocation15 + $0xf8] sm:$0xff]
    %v416 = vld [vmem:[#allocation15 + $0x100] sm:$0xff]
    %v417 = vld [vmem:[#allocation15 + $0x108] sm:$0xff]
    %v418 = vld [vmem:[#allocation15 + $0x110] sm:$0xff]
    %v419 = vld [vmem:[#allocation15 + $0x118] sm:$0xff]
    %v420 = vld [vmem:[#allocation15 + $0x120] sm:$0xff]
    %v421 = vld [vmem:[#allocation15 + $0x128] sm:$0xff]
    %v422 = vld [vmem:[#allocation15 + $0x130] sm:$0xff]
    %v423 = vld [vmem:[#allocation15 + $0x138] sm:$0xff]
    %v424 = vld [vmem:[#allocation15 + $0x140] sm:$0xff]
    %v425 = vld [vmem:[#allocation15 + $0x148] sm:$0xff]
    %v426 = vld [vmem:[#allocation15 + $0x150] sm:$0xff]
    %v427 = vld [vmem:[#allocation15 + $0x158] sm:$0xff]
    %v428 = vld [vmem:[#allocation15 + $0x160] sm:$0xff]
    %v429 = vld [vmem:[#allocation15 + $0x168] sm:$0xff]
    %v430 = vld [vmem:[#allocation15 + $0x170] sm:$0xff]
    %v431 = vld [vmem:[#allocation15 + $0x178] sm:$0xff]
    %v432 = vld [vmem:[#allocation15 + $0x180] sm:$0xff]
    %v433 = vld [vmem:[#allocation15 + $0x188] sm:$0xff]
    %v434 = vld [vmem:[#allocation15 + $0x190] sm:$0xff]
    %v435 = vld [vmem:[#allocation15 + $0x198] sm:$0xff]
    %v436 = vld [vmem:[#allocation15 + $0x1a0] sm:$0xff]
    %v437 = vld [vmem:[#allocation15 + $0x1a8] sm:$0xff]
    %v438 = vld [vmem:[#allocation15 + $0x1b0] sm:$0xff]
    %v439 = vld [vmem:[#allocation15 + $0x1b8] sm:$0xff]
    %v440 = vld [vmem:[#allocation15 + $0x1c0] sm:$0xff]
    %v441 = vld [vmem:[#allocation15 + $0x1c8] sm:$0xff]
    %v442 = vld [vmem:[#allocation15 + $0x1d0] sm:$0xff]
    %v443 = vld [vmem:[#allocation15 + $0x1d8] sm:$0xff]
    %v444 = vld [vmem:[#allocation15 + $0x1e0] sm:$0xff]
    %v445 = vld [vmem:[#allocation15 + $0x1e8] sm:$0xff]
    %v446 = vld [vmem:[#allocation15 + $0x1f0] sm:$0xff]
    %v447 = vld [vmem:[#allocation15 + $0x1f8] sm:$0xff]
    %v448 = vld [vmem:[#allocation15 + $0x200] sm:$0xff]
    %v449 = vld [vmem:[#allocation15 + $0x208] sm:$0xff]
    %v450 = vld [vmem:[#allocation15 + $0x210] sm:$0xff]
    %v451 = vld [vmem:[#allocation15 + $0x218] sm:$0xff]
    %v452 = vld [vmem:[#allocation15 + $0x220] sm:$0xff]
    %v453 = vld [vmem:[#allocation15 + $0x228] sm:$0xff]
    %v454 = vld [vmem:[#allocation15 + $0x230] sm:$0xff]
    %v455 = vld [vmem:[#allocation15 + $0x238] sm:$0xff]
    %v456 = vld [vmem:[#allocation15 + $0x240] sm:$0xff]
    %v457 = vld [vmem:[#allocation15 + $0x248] sm:$0xff]
    %v458 = vld [vmem:[#allocation15 + $0x250] sm:$0xff]
    %v459 = vld [vmem:[#allocation15 + $0x258] sm:$0xff]
    %v460 = vld [vmem:[#allocation15 + $0x260] sm:$0xff]
    %v461 = vld [vmem:[#allocation15 + $0x268] sm:$0xff]
    %v462 = vld [vmem:[#allocation15 + $0x270] sm:$0xff]
    %v463 = vld [vmem:[#allocation15 + $0x278] sm:$0xff]
    %v464 = vld [vmem:[#allocation15 + $0x280] sm:$0xff]
    %v465 = vld [vmem:[#allocation15 + $0x288] sm:$0xff]
    %v466 = vld [vmem:[#allocation15 + $0x290] sm:$0xff]
    %v467 = vld [vmem:[#allocation15 + $0x298] sm:$0xff]
    %v468 = vld [vmem:[#allocation15 + $0x2a0] sm:$0xff]
    %v469 = vld [vmem:[#allocation15 + $0x2a8] sm:$0xff]
    %v470 = vld [vmem:[#allocation15 + $0x2b0] sm:$0xff]
    %v471 = vld [vmem:[#allocation15 + $0x2b8] sm:$0xff]
    %v472 = vld [vmem:[#allocation15 + $0x2c0] sm:$0xff]
    %v473 = vld [vmem:[#allocation15 + $0x2c8] sm:$0xff]
    %v474 = vld [vmem:[#allocation15 + $0x2d0] sm:$0xff]
    %v475 = vld [vmem:[#allocation15 + $0x2d8] sm:$0xff]
    %v476 = vld [vmem:[#allocation15 + $0x2e0] sm:$0xff]
    %v477 = vld [vmem:[#allocation15 + $0x2e8] sm:$0xff]
    %v478 = vld [vmem:[#allocation15 + $0x2f0] sm:$0xff]
    %v479 = vld [vmem:[#allocation15 + $0x2f8] sm:$0xff]
    %v480 = vperm.slane %v210, 3
    %v481 = vperm.slane %v211, 3
    %v482 = vperm.slane %v212, 3
    %v483 = vperm.slane %v213, 3
    %v484 = vperm.slane %v214, 3
    %v485 = vperm.slane %v215, 3
    %486 = vmatpush.msra.mxu0 %v474
    %487 = vmatpush.msra.mxu0 %v468
    %488 = vmatpush.msra.mxu0 %v462
    %489 = vmatpush.msra.mxu0 %v456
    %490 = vmatpush.msra.mxu0 %v450
    %491 = vmatpush.msra.mxu0 %v444
    %492 = vmatpush.msra.mxu0 %v438
    %493 = vmatpush.msra.mxu0 %v432
    %494 = vmatpush.msra.mxu0 %v426
    %495 = vmatpush.msra.mxu0 %v420
    %496 = vmatpush.msra.mxu0 %v414
    %497 = vmatpush.msra.mxu0 %v408
    %498 = vmatpush.msra.mxu0 %v402
    %499 = vmatpush.msra.mxu0 %v396
    %500 = vmatpush.msra.mxu0 %v390
    %501 = vmatpush.msra.mxu0 %v384
    %502 = vmatmul.f32.gmra.mxu0 %v382
    %v503 = vpop.f32.mrf.mxu0
    %v504 = vadd.f32 %v480, %v503
    %505 = vmatmul.f32.gmra.mxu0 %v383
    %v506 = vpop.f32.mrf.mxu0
    %v507 = vadd.f32 %v480, %v506
    %508 = vdwg.mxu0
    %509 = vmatpush.msra.mxu0 %v475
    %510 = vmatpush.msra.mxu0 %v469
    %511 = vmatpush.msra.mxu0 %v463
    %512 = vmatpush.msra.mxu0 %v457
    %513 = vmatpush.msra.mxu0 %v451
    %514 = vmatpush.msra.mxu0 %v445
    %515 = vmatpush.msra.mxu0 %v439
    %516 = vmatpush.msra.mxu0 %v433
    %517 = vmatpush.msra.mxu0 %v427
    %518 = vmatpush.msra.mxu0 %v421
    %519 = vmatpush.msra.mxu0 %v415
    %520 = vmatpush.msra.mxu0 %v409
    %521 = vmatpush.msra.mxu0 %v403
    %522 = vmatpush.msra.mxu0 %v397
    %523 = vmatpush.msra.mxu0 %v391
    %524 = vmatpush.msra.mxu0 %v385
    %525 = vmatmul.f32.gmra.mxu0 %v382
    %v526 = vpop.f32.mrf.mxu0
    %v527 = vadd.f32 %v481, %v526
    %528 = vmatmul.f32.gmra.mxu0 %v383
    %v529 = vpop.f32.mrf.mxu0
    %v530 = vadd.f32 %v481, %v529
    %531 = vdwg.mxu0
    %532 = vmatpush.msra.mxu0 %v476
    %533 = vmatpush.msra.mxu0 %v470
    %534 = vmatpush.msra.mxu0 %v464
    %535 = vmatpush.msra.mxu0 %v458
    %536 = vmatpush.msra.mxu0 %v452
    %537 = vmatpush.msra.mxu0 %v446
    %538 = vmatpush.msra.mxu0 %v440
    %539 = vmatpush.msra.mxu0 %v434
    %540 = vmatpush.msra.mxu0 %v428
    %541 = vmatpush.msra.mxu0 %v422
    %542 = vmatpush.msra.mxu0 %v416
    %543 = vmatpush.msra.mxu0 %v410
    %544 = vmatpush.msra.mxu0 %v404
    %545 = vmatpush.msra.mxu0 %v398
    %546 = vmatpush.msra.mxu0 %v392
    %547 = vmatpush.msra.mxu0 %v386
    %548 = vmatmul.f32.gmra.mxu0 %v382
    %v549 = vpop.f32.mrf.mxu0
    %v550 = vadd.f32 %v482, %v549
    %551 = vmatmul.f32.gmra.mxu0 %v383
    %v552 = vpop.f32.mrf.mxu0
    %v553 = vadd.f32 %v482, %v552
    %554 = vdwg.mxu0
    %555 = vmatpush.msra.mxu0 %v477
    %556 = vmatpush.msra.mxu0 %v471
    %557 = vmatpush.msra.mxu0 %v465
    %558 = vmatpush.msra.mxu0 %v459
    %559 = vmatpush.msra.mxu0 %v453
    %560 = vmatpush.msra.mxu0 %v447
    %561 = vmatpush.msra.mxu0 %v441
    %562 = vmatpush.msra.mxu0 %v435
    %563 = vmatpush.msra.mxu0 %v429
    %564 = vmatpush.msra.mxu0 %v423
    %565 = vmatpush.msra.mxu0 %v417
    %566 = vmatpush.msra.mxu0 %v411
    %567 = vmatpush.msra.mxu0 %v405
    %568 = vmatpush.msra.mxu0 %v399
    %569 = vmatpush.msra.mxu0 %v393
    %570 = vmatpush.msra.mxu0 %v387
    %571 = vmatmul.f32.gmra.mxu0 %v382
    %v572 = vpop.f32.mrf.mxu0
    %v573 = vadd.f32 %v483, %v572
    %574 = vmatmul.f32.gmra.mxu0 %v383
    %v575 = vpop.f32.mrf.mxu0
    %v576 = vadd.f32 %v483, %v575
    %577 = vdwg.mxu0
    %578 = vmatpush.msra.mxu0 %v478
    %579 = vmatpush.msra.mxu0 %v472
    %580 = vmatpush.msra.mxu0 %v466
    %581 = vmatpush.msra.mxu0 %v460
    %582 = vmatpush.msra.mxu0 %v454
    %583 = vmatpush.msra.mxu0 %v448
    %584 = vmatpush.msra.mxu0 %v442
    %585 = vmatpush.msra.mxu0 %v436
    %586 = vmatpush.msra.mxu0 %v430
    %587 = vmatpush.msra.mxu0 %v424
    %588 = vmatpush.msra.mxu0 %v418
    %589 = vmatpush.msra.mxu0 %v412
    %590 = vmatpush.msra.mxu0 %v406
    %591 = vmatpush.msra.mxu0 %v400
    %592 = vmatpush.msra.mxu0 %v394
    %593 = vmatpush.msra.mxu0 %v388
    %594 = vmatmul.f32.gmra.mxu0 %v382
    %v595 = vpop.f32.mrf.mxu0
    %v596 = vadd.f32 %v484, %v595
    %597 = vmatmul.f32.gmra.mxu0 %v383
    %v598 = vpop.f32.mrf.mxu0
    %v599 = vadd.f32 %v484, %v598
    %600 = vdwg.mxu0
    %601 = vmatpush.msra.mxu0 %v479
    %602 = vmatpush.msra.mxu0 %v473
    %603 = vmatpush.msra.mxu0 %v467
    %604 = vmatpush.msra.mxu0 %v461
    %605 = vmatpush.msra.mxu0 %v455
    %606 = vmatpush.msra.mxu0 %v449
    %607 = vmatpush.msra.mxu0 %v443
    %608 = vmatpush.msra.mxu0 %v437
    %609 = vmatpush.msra.mxu0 %v431
    %610 = vmatpush.msra.mxu0 %v425
    %611 = vmatpush.msra.mxu0 %v419
    %612 = vmatpush.msra.mxu0 %v413
    %613 = vmatpush.msra.mxu0 %v407
    %614 = vmatpush.msra.mxu0 %v401
    %615 = vmatpush.msra.mxu0 %v395
    %616 = vmatpush.msra.mxu0 %v389
    %617 = vmatmul.f32.gmra.mxu0 %v382
    %v618 = vpop.f32.mrf.mxu0
    %v619 = vadd.f32 %v485, %v618
    %620 = vmatmul.f32.gmra.mxu0 %v383
    %v621 = vpop.f32.mrf.mxu0
    %v622 = vadd.f32 %v485, %v621
    %623 = vdwg.mxu0
    %v624 = vtanh.pop %v504
    %v625 = vtanh.pop %v527
    %v626 = vtanh.pop %v550
    %v627 = vtanh.pop %v573
    %v628 = vtanh.pop %v596
    %v629 = vtanh.pop %v619
    %v630 = vtanh.pop %v507
    %v631 = vtanh.pop %v530
    %v632 = vtanh.pop %v553
    %v633 = vtanh.pop %v576
    %v634 = vtanh.pop %v599
    %v635 = vtanh.pop %v622
    %636 = vst [vmem:[#allocation21] sm:$0xff] %v624
    %637 = vst [vmem:[#allocation21 + $0x8] sm:$0xff] %v625
    %638 = vst [vmem:[#allocation21 + $0x10] sm:$0xff] %v626
    %639 = vst [vmem:[#allocation21 + $0x18] sm:$0xff] %v627
    %640 = vst [vmem:[#allocation21 + $0x20] sm:$0xff] %v628
    %641 = vst [vmem:[#allocation21 + $0x28] sm:$0xff] %v629
    %v642 = vld [vmem:[#allocation6] sm:$0xff]
    %v643 = vld [vmem:[#allocation6 + $0x8] sm:$0xff]
    %v644 = vld [vmem:[#allocation6 + $0x10] sm:$0xff]
    %v645 = vld [vmem:[#allocation6 + $0x18] sm:$0xff]
    %v646 = vld [vmem:[#allocation6 + $0x20] sm:$0xff]
    %v647 = vld [vmem:[#allocation6 + $0x28] sm:$0xff]
    %v648 = vld [vmem:[#allocation17] sm:$0xff]
    %v649 = vld [vmem:[#allocation17 + $0x8] sm:$0xff]
    %v650 = vld [vmem:[#allocation17 + $0x10] sm:$0xff]
    %v651 = vld [vmem:[#allocation17 + $0x18] sm:$0xff]
    %v652 = vld [vmem:[#allocation17 + $0x20] sm:$0xff]
    %v653 = vld [vmem:[#allocation17 + $0x28] sm:$0xff]
    %v654 = vld [vmem:[#allocation17 + $0x30] sm:$0xff]
    %v655 = vld [vmem:[#allocation17 + $0x38] sm:$0xff]
    %v656 = vld [vmem:[#allocation17 + $0x40] sm:$0xff]
    %v657 = vld [vmem:[#allocation17 + $0x48] sm:$0xff]
    %v658 = vld [vmem:[#allocation17 + $0x50] sm:$0xff]
    %v659 = vld [vmem:[#allocation17 + $0x58] sm:$0xff]
    %v660 = vld [vmem:[#allocation17 + $0x60] sm:$0xff]
    %v661 = vld [vmem:[#allocation17 + $0x68] sm:$0xff]
    %v662 = vld [vmem:[#allocation17 + $0x70] sm:$0xff]
    %v663 = vld [vmem:[#allocation17 + $0x78] sm:$0xff]
    %v664 = vld [vmem:[#allocation17 + $0x80] sm:$0xff]
    %v665 = vld [vmem:[#allocation17 + $0x88] sm:$0xff]
    %v666 = vld [vmem:[#allocation17 + $0x90] sm:$0xff]
    %v667 = vld [vmem:[#allocation17 + $0x98] sm:$0xff]
    %v668 = vld [vmem:[#allocation17 + $0xa0] sm:$0xff]
    %v669 = vld [vmem:[#allocation17 + $0xa8] sm:$0xff]
    %v670 = vld [vmem:[#allocation17 + $0xb0] sm:$0xff]
    %v671 = vld [vmem:[#allocation17 + $0xb8] sm:$0xff]
    %v672 = vld [vmem:[#allocation17 + $0xc0] sm:$0xff]
    %v673 = vld [vmem:[#allocation17 + $0xc8] sm:$0xff]
    %v674 = vld [vmem:[#allocation17 + $0xd0] sm:$0xff]
    %v675 = vld [vmem:[#allocation17 + $0xd8] sm:$0xff]
    %v676 = vld [vmem:[#allocation17 + $0xe0] sm:$0xff]
    %v677 = vld [vmem:[#allocation17 + $0xe8] sm:$0xff]
    %v678 = vld [vmem:[#allocation17 + $0xf0] sm:$0xff]
    %v679 = vld [vmem:[#allocation17 + $0xf8] sm:$0xff]
    %v680 = vld [vmem:[#allocation17 + $0x100] sm:$0xff]
    %v681 = vld [vmem:[#allocation17 + $0x108] sm:$0xff]
    %v682 = vld [vmem:[#allocation17 + $0x110] sm:$0xff]
    %v683 = vld [vmem:[#allocation17 + $0x118] sm:$0xff]
    %v684 = vld [vmem:[#allocation17 + $0x120] sm:$0xff]
    %v685 = vld [vmem:[#allocation17 + $0x128] sm:$0xff]
    %v686 = vld [vmem:[#allocation17 + $0x130] sm:$0xff]
    %v687 = vld [vmem:[#allocation17 + $0x138] sm:$0xff]
    %v688 = vld [vmem:[#allocation17 + $0x140] sm:$0xff]
    %v689 = vld [vmem:[#allocation17 + $0x148] sm:$0xff]
    %v690 = vld [vmem:[#allocation17 + $0x150] sm:$0xff]
    %v691 = vld [vmem:[#allocation17 + $0x158] sm:$0xff]
    %v692 = vld [vmem:[#allocation17 + $0x160] sm:$0xff]
    %v693 = vld [vmem:[#allocation17 + $0x168] sm:$0xff]
    %v694 = vld [vmem:[#allocation17 + $0x170] sm:$0xff]
    %v695 = vld [vmem:[#allocation17 + $0x178] sm:$0xff]
    %v696 = vld [vmem:[#allocation17 + $0x180] sm:$0xff]
    %v697 = vld [vmem:[#allocation17 + $0x188] sm:$0xff]
    %v698 = vld [vmem:[#allocation17 + $0x190] sm:$0xff]
    %v699 = vld [vmem:[#allocation17 + $0x198] sm:$0xff]
    %v700 = vld [vmem:[#allocation17 + $0x1a0] sm:$0xff]
    %v701 = vld [vmem:[#allocation17 + $0x1a8] sm:$0xff]
    %v702 = vld [vmem:[#allocation17 + $0x1b0] sm:$0xff]
    %v703 = vld [vmem:[#allocation17 + $0x1b8] sm:$0xff]
    %v704 = vld [vmem:[#allocation17 + $0x1c0] sm:$0xff]
    %v705 = vld [vmem:[#allocation17 + $0x1c8] sm:$0xff]
    %v706 = vld [vmem:[#allocation17 + $0x1d0] sm:$0xff]
    %v707 = vld [vmem:[#allocation17 + $0x1d8] sm:$0xff]
    %v708 = vld [vmem:[#allocation17 + $0x1e0] sm:$0xff]
    %v709 = vld [vmem:[#allocation17 + $0x1e8] sm:$0xff]
    %v710 = vld [vmem:[#allocation17 + $0x1f0] sm:$0xff]
    %v711 = vld [vmem:[#allocation17 + $0x1f8] sm:$0xff]
    %v712 = vld [vmem:[#allocation17 + $0x200] sm:$0xff]
    %v713 = vld [vmem:[#allocation17 + $0x208] sm:$0xff]
    %v714 = vld [vmem:[#allocation17 + $0x210] sm:$0xff]
    %v715 = vld [vmem:[#allocation17 + $0x218] sm:$0xff]
    %v716 = vld [vmem:[#allocation17 + $0x220] sm:$0xff]
    %v717 = vld [vmem:[#allocation17 + $0x228] sm:$0xff]
    %v718 = vld [vmem:[#allocation17 + $0x230] sm:$0xff]
    %v719 = vld [vmem:[#allocation17 + $0x238] sm:$0xff]
    %v720 = vld [vmem:[#allocation17 + $0x240] sm:$0xff]
    %v721 = vld [vmem:[#allocation17 + $0x248] sm:$0xff]
    %v722 = vld [vmem:[#allocation17 + $0x250] sm:$0xff]
    %v723 = vld [vmem:[#allocation17 + $0x258] sm:$0xff]
    %v724 = vld [vmem:[#allocation17 + $0x260] sm:$0xff]
    %v725 = vld [vmem:[#allocation17 + $0x268] sm:$0xff]
    %v726 = vld [vmem:[#allocation17 + $0x270] sm:$0xff]
    %v727 = vld [vmem:[#allocation17 + $0x278] sm:$0xff]
    %v728 = vld [vmem:[#allocation17 + $0x280] sm:$0xff]
    %v729 = vld [vmem:[#allocation17 + $0x288] sm:$0xff]
    %v730 = vld [vmem:[#allocation17 + $0x290] sm:$0xff]
    %v731 = vld [vmem:[#allocation17 + $0x298] sm:$0xff]
    %v732 = vld [vmem:[#allocation17 + $0x2a0] sm:$0xff]
    %v733 = vld [vmem:[#allocation17 + $0x2a8] sm:$0xff]
    %v734 = vld [vmem:[#allocation17 + $0x2b0] sm:$0xff]
    %v735 = vld [vmem:[#allocation17 + $0x2b8] sm:$0xff]
    %v736 = vld [vmem:[#allocation17 + $0x2c0] sm:$0xff]
    %v737 = vld [vmem:[#allocation17 + $0x2c8] sm:$0xff]
    %v738 = vld [vmem:[#allocation17 + $0x2d0] sm:$0xff]
    %v739 = vld [vmem:[#allocation17 + $0x2d8] sm:$0xff]
    %v740 = vld [vmem:[#allocation17 + $0x2e0] sm:$0xff]
    %v741 = vld [vmem:[#allocation17 + $0x2e8] sm:$0xff]
    %v742 = vld [vmem:[#allocation17 + $0x2f0] sm:$0xff]
    %v743 = vld [vmem:[#allocation17 + $0x2f8] sm:$0xff]
    %v744 = vperm.slane %v210, 4
    %745 = vmatpush.msra.mxu0 %v663
    %746 = vmatpush.msra.mxu0 %v662
    %747 = vmatpush.msra.mxu0 %v661
    %748 = vmatpush.msra.mxu0 %v660
    %749 = vmatpush.msra.mxu0 %v659
    %750 = vmatpush.msra.mxu0 %v658
    %751 = vmatpush.msra.mxu0 %v657
    %752 = vmatpush.msra.mxu0 %v656
    %753 = vmatpush.msra.mxu0 %v655
    %754 = vmatpush.msra.mxu0 %v654
    %755 = vmatpush.msra.mxu0 %v653
    %756 = vmatpush.msra.mxu0 %v652
    %757 = vmatpush.msra.mxu0 %v651
    %758 = vmatpush.msra.mxu0 %v650
    %759 = vmatpush.msra.mxu0 %v649
    %760 = vmatpush.msra.mxu0 %v648
    %761 = vmatmul.f32.gmra.mxu0 %v642
    %v762 = vpop.f32.mrf.mxu0
    %v763 = vadd.f32 %v744, %v762
    %764 = vdwg.mxu0
    %765 = vmatpush.msra.mxu0 %v679
    %766 = vmatpush.msra.mxu0 %v678
    %767 = vmatpush.msra.mxu0 %v677
    %768 = vmatpush.msra.mxu0 %v676
    %769 = vmatpush.msra.mxu0 %v675
    %770 = vmatpush.msra.mxu0 %v674
    %771 = vmatpush.msra.mxu0 %v673
    %772 = vmatpush.msra.mxu0 %v672
    %773 = vmatpush.msra.mxu0 %v671
    %774 = vmatpush.msra.mxu0 %v670
    %775 = vmatpush.msra.mxu0 %v669
    %776 = vmatpush.msra.mxu0 %v668
    %777 = vmatpush.msra.mxu0 %v667
    %778 = vmatpush.msra.mxu0 %v666
    %779 = vmatpush.msra.mxu0 %v665
    %780 = vmatpush.msra.mxu0 %v664
    %781 = vmatmul.f32.gmra.mxu0 %v643
    %v782 = vpop.f32.mrf.mxu0
    %v783 = vadd.f32 %v763, %v782
    %784 = vdwg.mxu0
    %785 = vmatpush.msra.mxu0 %v695
    %786 = vmatpush.msra.mxu0 %v694
    %787 = vmatpush.msra.mxu0 %v693
    %788 = vmatpush.msra.mxu0 %v692
    %789 = vmatpush.msra.mxu0 %v691
    %790 = vmatpush.msra.mxu0 %v690
    %791 = vmatpush.msra.mxu0 %v689
    %792 = vmatpush.msra.mxu0 %v688
    %793 = vmatpush.msra.mxu0 %v687
    %794 = vmatpush.msra.mxu0 %v686
    %795 = vmatpush.msra.mxu0 %v685
    %796 = vmatpush.msra.mxu0 %v684
    %797 = vmatpush.msra.mxu0 %v683
    %798 = vmatpush.msra.mxu0 %v682
    %799 = vmatpush.msra.mxu0 %v681
    %800 = vmatpush.msra.mxu0 %v680
    %801 = vmatmul.f32.gmra.mxu0 %v644
    %v802 = vpop.f32.mrf.mxu0
    %v803 = vadd.f32 %v783, %v802
    %804 = vdwg.mxu0
    %805 = vmatpush.msra.mxu0 %v711
    %806 = vmatpush.msra.mxu0 %v710
    %807 = vmatpush.msra.mxu0 %v709
    %808 = vmatpush.msra.mxu0 %v708
    %809 = vmatpush.msra.mxu0 %v707
    %810 = vmatpush.msra.mxu0 %v706
    %811 = vmatpush.msra.mxu0 %v705
    %812 = vmatpush.msra.mxu0 %v704
    %813 = vmatpush.msra.mxu0 %v703
    %814 = vmatpush.msra.mxu0 %v702
    %815 = vmatpush.msra.mxu0 %v701
    %816 = vmatpush.msra.mxu0 %v700
    %817 = vmatpush.msra.mxu0 %v699
    %818 = vmatpush.msra.mxu0 %v698
    %819 = vmatpush.msra.mxu0 %v697
    %820 = vmatpush.msra.mxu0 %v696
    %821 = vmatmul.f32.gmra.mxu0 %v645
    %v822 = vpop.f32.mrf.mxu0
    %v823 = vadd.f32 %v803, %v822
    %824 = vdwg.mxu0
    %825 = vmatpush.msra.mxu0 %v727
    %826 = vmatpush.msra.mxu0 %v726
    %827 = vmatpush.msra.mxu0 %v725
    %828 = vmatpush.msra.mxu0 %v724
    %829 = vmatpush.msra.mxu0 %v723
    %830 = vmatpush.msra.mxu0 %v722
    %831 = vmatpush.msra.mxu0 %v721
    %832 = vmatpush.msra.mxu0 %v720
    %833 = vmatpush.msra.mxu0 %v719
    %834 = vmatpush.msra.mxu0 %v718
    %835 = vmatpush.msra.mxu0 %v717
    %836 = vmatpush.msra.mxu0 %v716
    %837 = vmatpush.msra.mxu0 %v715
    %838 = vmatpush.msra.mxu0 %v714
    %839 = vmatpush.msra.mxu0 %v713
    %840 = vmatpush.msra.mxu0 %v712
    %841 = vmatmul.f32.gmra.mxu0 %v646
    %v842 = vpop.f32.mrf.mxu0
    %v843 = vadd.f32 %v823, %v842
    %844 = vdwg.mxu0
    %845 = vmatpush.msra.mxu0 %v743
    %846 = vmatpush.msra.mxu0 %v742
    %847 = vmatpush.msra.mxu0 %v741
    %848 = vmatpush.msra.mxu0 %v740
    %849 = vmatpush.msra.mxu0 %v739
    %850 = vmatpush.msra.mxu0 %v738
    %851 = vmatpush.msra.mxu0 %v737
    %852 = vmatpush.msra.mxu0 %v736
    %853 = vmatpush.msra.mxu0 %v735
    %854 = vmatpush.msra.mxu0 %v734
    %855 = vmatpush.msra.mxu0 %v733
    %856 = vmatpush.msra.mxu0 %v732
    %857 = vmatpush.msra.mxu0 %v731
    %858 = vmatpush.msra.mxu0 %v730
    %859 = vmatpush.msra.mxu0 %v729
    %860 = vmatpush.msra.mxu0 %v728
    %861 = vmatmul.f32.gmra.mxu0 %v647
    %v862 = vpop.f32.mrf.mxu0
    %v863 = vadd.f32 %v843, %v862
    %864 = vdwg.mxu0
    %v865 = vmax.f32 %v863, 0.0
    %866 = vmatpush.msra.mxu0 %v663
    %867 = vmatpush.msra.mxu0 %v662
    %868 = vmatpush.msra.mxu0 %v661
    %869 = vmatpush.msra.mxu0 %v660
    %870 = vmatpush.msra.mxu0 %v659
    %871 = vmatpush.msra.mxu0 %v658
    %872 = vmatpush.msra.mxu0 %v657
    %873 = vmatpush.msra.mxu0 %v656
    %874 = vmatpush.msra.mxu0 %v655
    %875 = vmatpush.msra.mxu0 %v654
    %876 = vmatpush.msra.mxu0 %v653
    %877 = vmatpush.msra.mxu0 %v652
    %878 = vmatpush.msra.mxu0 %v651
    %879 = vmatpush.msra.mxu0 %v650
    %880 = vmatpush.msra.mxu0 %v649
    %881 = vmatpush.msra.mxu0 %v648
    %882 = vmatmul.f32.gmra.mxu0 %v624
    %v883 = vpop.f32.mrf.mxu0
    %v884 = vadd.f32 %v744, %v883
    %885 = vmatmul.f32.gmra.mxu0 %v630
    %v886 = vpop.f32.mrf.mxu0
    %v887 = vadd.f32 %v744, %v886
    %888 = vdwg.mxu0
    %889 = vmatpush.msra.mxu0 %v679
    %890 = vmatpush.msra.mxu0 %v678
    %891 = vmatpush.msra.mxu0 %v677
    %892 = vmatpush.msra.mxu0 %v676
    %893 = vmatpush.msra.mxu0 %v675
    %894 = vmatpush.msra.mxu0 %v674
    %895 = vmatpush.msra.mxu0 %v673
    %896 = vmatpush.msra.mxu0 %v672
    %897 = vmatpush.msra.mxu0 %v671
    %898 = vmatpush.msra.mxu0 %v670
    %899 = vmatpush.msra.mxu0 %v669
    %900 = vmatpush.msra.mxu0 %v668
    %901 = vmatpush.msra.mxu0 %v667
    %902 = vmatpush.msra.mxu0 %v666
    %903 = vmatpush.msra.mxu0 %v665
    %904 = vmatpush.msra.mxu0 %v664
    %905 = vmatmul.f32.gmra.mxu0 %v625
    %v906 = vpop.f32.mrf.mxu0
    %v907 = vadd.f32 %v884, %v906
    %908 = vmatmul.f32.gmra.mxu0 %v631
    %v909 = vpop.f32.mrf.mxu0
    %v910 = vadd.f32 %v887, %v909
    %911 = vdwg.mxu0
    %912 = vmatpush.msra.mxu0 %v695
    %913 = vmatpush.msra.mxu0 %v694
    %914 = vmatpush.msra.mxu0 %v693
    %915 = vmatpush.msra.mxu0 %v692
    %916 = vmatpush.msra.mxu0 %v691
    %917 = vmatpush.msra.mxu0 %v690
    %918 = vmatpush.msra.mxu0 %v689
    %919 = vmatpush.msra.mxu0 %v688
    %920 = vmatpush.msra.mxu0 %v687
    %921 = vmatpush.msra.mxu0 %v686
    %922 = vmatpush.msra.mxu0 %v685
    %923 = vmatpush.msra.mxu0 %v684
    %924 = vmatpush.msra.mxu0 %v683
    %925 = vmatpush.msra.mxu0 %v682
    %926 = vmatpush.msra.mxu0 %v681
    %927 = vmatpush.msra.mxu0 %v680
    %928 = vmatmul.f32.gmra.mxu0 %v626
    %v929 = vpop.f32.mrf.mxu0
    %v930 = vadd.f32 %v907, %v929
    %931 = vmatmul.f32.gmra.mxu0 %v632
    %v932 = vpop.f32.mrf.mxu0
    %v933 = vadd.f32 %v910, %v932
    %934 = vdwg.mxu0
    %935 = vmatpush.msra.mxu0 %v711
    %936 = vmatpush.msra.mxu0 %v710
    %937 = vmatpush.msra.mxu0 %v709
    %938 = vmatpush.msra.mxu0 %v708
    %939 = vmatpush.msra.mxu0 %v707
    %940 = vmatpush.msra.mxu0 %v706
    %941 = vmatpush.msra.mxu0 %v705
    %942 = vmatpush.msra.mxu0 %v704
    %943 = vmatpush.msra.mxu0 %v703
    %944 = vmatpush.msra.mxu0 %v702
    %945 = vmatpush.msra.mxu0 %v701
    %946 = vmatpush.msra.mxu0 %v700
    %947 = vmatpush.msra.mxu0 %v699
    %948 = vmatpush.msra.mxu0 %v698
    %949 = vmatpush.msra.mxu0 %v697
    %950 = vmatpush.msra.mxu0 %v696
    %951 = vmatmul.f32.gmra.mxu0 %v627
    %v952 = vpop.f32.mrf.mxu0
    %v953 = vadd.f32 %v930, %v952
    %954 = vmatmul.f32.gmra.mxu0 %v633
    %v955 = vpop.f32.mrf.mxu0
    %v956 = vadd.f32 %v933, %v955
    %957 = vdwg.mxu0
    %958 = vmatpush.msra.mxu0 %v727
    %959 = vmatpush.msra.mxu0 %v726
    %960 = vmatpush.msra.mxu0 %v725
    %961 = vmatpush.msra.mxu0 %v724
    %962 = vmatpush.msra.mxu0 %v723
    %963 = vmatpush.msra.mxu0 %v722
    %964 = vmatpush.msra.mxu0 %v721
    %965 = vmatpush.msra.mxu0 %v720
    %966 = vmatpush.msra.mxu0 %v719
    %967 = vmatpush.msra.mxu0 %v718
    %968 = vmatpush.msra.mxu0 %v717
    %969 = vmatpush.msra.mxu0 %v716
    %970 = vmatpush.msra.mxu0 %v715
    %971 = vmatpush.msra.mxu0 %v714
    %972 = vmatpush.msra.mxu0 %v713
    %973 = vmatpush.msra.mxu0 %v712
    %974 = vmatmul.f32.gmra.mxu0 %v628
    %v975 = vpop.f32.mrf.mxu0
    %v976 = vadd.f32 %v953, %v975
    %977 = vmatmul.f32.gmra.mxu0 %v634
    %v978 = vpop.f32.mrf.mxu0
    %v979 = vadd.f32 %v956, %v978
    %980 = vdwg.mxu0
    %981 = vmatpush.msra.mxu0 %v743
    %982 = vmatpush.msra.mxu0 %v742
    %983 = vmatpush.msra.mxu0 %v741
    %984 = vmatpush.msra.mxu0 %v740
    %985 = vmatpush.msra.mxu0 %v739
    %986 = vmatpush.msra.mxu0 %v738
    %987 = vmatpush.msra.mxu0 %v737
    %988 = vmatpush.msra.mxu0 %v736
    %989 = vmatpush.msra.mxu0 %v735
    %990 = vmatpush.msra.mxu0 %v734
    %991 = vmatpush.msra.mxu0 %v733
    %992 = vmatpush.msra.mxu0 %v732
    %993 = vmatpush.msra.mxu0 %v731
    %994 = vmatpush.msra.mxu0 %v730
    %995 = vmatpush.msra.mxu0 %v729
    %996 = vmatpush.msra.mxu0 %v728
    %997 = vmatmul.f32.gmra.mxu0 %v629
    %v998 = vpop.f32.mrf.mxu0
    %v999 = vadd.f32 %v976, %v998
    %1000 = vmatmul.f32.gmra.mxu0 %v635
    %v1001 = vpop.f32.mrf.mxu0
    %v1002 = vadd.f32 %v979, %v1001
    %1003 = vdwg.mxu0
    %v1004 = vmax.f32 %v999, 0.0
    %v1005 = vmax.f32 %v1002, 0.0
    %1006 = vst [vmem:[#allocation24] sm:$0xff] %v865
    %1007 = vst [vmem:[#allocation25] sm:$0xff] %v1004
    %v1008 = vld [vmem:[#allocation18] sm:$0xff]
    %v1009 = vld [vmem:[#allocation18 + $0x8] sm:$0xff]
    %v1010 = vld [vmem:[#allocation18 + $0x10] sm:$0xff]
    %v1011 = vld [vmem:[#allocation18 + $0x18] sm:$0xff]
    %v1012 = vld [vmem:[#allocation18 + $0x20] sm:$0xff]
    %v1013 = vld [vmem:[#allocation18 + $0x28] sm:$0xff]
    %v1014 = vld [vmem:[#allocation18 + $0x30] sm:$0xff]
    %v1015 = vld [vmem:[#allocation18 + $0x38] sm:$0xff]
    %v1016 = vld [vmem:[#allocation18 + $0x40] sm:$0xff]
    %v1017 = vld [vmem:[#allocation18 + $0x48] sm:$0xff]
    %v1018 = vld [vmem:[#allocation18 + $0x50] sm:$0xff]
    %v1019 = vld [vmem:[#allocation18 + $0x58] sm:$0xff]
    %v1020 = vld [vmem:[#allocation18 + $0x60] sm:$0xff]
    %v1021 = vld [vmem:[#allocation18 + $0x68] sm:$0xff]
    %v1022 = vld [vmem:[#allocation18 + $0x70] sm:$0xff]
    %v1023 = vld [vmem:[#allocation18 + $0x78] sm:$0xff]
    %v1024 = vperm.slane %v210, 5
    %1025 = vmatpush.msra.mxu0 %v1023
    %1026 = vmatpush.msra.mxu0 %v1022
    %1027 = vmatpush.msra.mxu0 %v1021
    %1028 = vmatpush.msra.mxu0 %v1020
    %1029 = vmatpush.msra.mxu0 %v1019
    %1030 = vmatpush.msra.mxu0 %v1018
    %1031 = vmatpush.msra.mxu0 %v1017
    %1032 = vmatpush.msra.mxu0 %v1016
    %1033 = vmatpush.msra.mxu0 %v1015
    %1034 = vmatpush.msra.mxu0 %v1014
    %1035 = vmatpush.msra.mxu0 %v1013
    %1036 = vmatpush.msra.mxu0 %v1012
    %1037 = vmatpush.msra.mxu0 %v1011
    %1038 = vmatpush.msra.mxu0 %v1010
    %1039 = vmatpush.msra.mxu0 %v1009
    %1040 = vmatpush.msra.mxu0 %v1008
    %1041 = vmatmul.f32.gmra.mxu0 %v865
    %v1042 = vpop.f32.mrf.mxu0
    %v1043 = vadd.f32 %v1024, %v1042
    %1044 = vdwg.mxu0
    %v1045 = vmul.f32 %v1043, 0.5
    %v1046 = vtanh.pop %v1045
    %v1047 = vadd.f32 %v1046, 1.0
    %v1048 = vmul.f32 %v1047, 0.5
    %1049 = vst [vmem:[#allocation27] sm:$0xff] %v1048
    %v1050 = vld [vmem:[#allocation18] sm:$0xff]
    %v1051 = vld [vmem:[#allocation18 + $0x8] sm:$0xff]
    %v1052 = vld [vmem:[#allocation18 + $0x10] sm:$0xff]
    %v1053 = vld [vmem:[#allocation18 + $0x18] sm:$0xff]
    %v1054 = vld [vmem:[#allocation18 + $0x20] sm:$0xff]
    %v1055 = vld [vmem:[#allocation18 + $0x28] sm:$0xff]
    %v1056 = vld [vmem:[#allocation18 + $0x30] sm:$0xff]
    %v1057 = vld [vmem:[#allocation18 + $0x38] sm:$0xff]
    %v1058 = vld [vmem:[#allocation18 + $0x40] sm:$0xff]
    %v1059 = vld [vmem:[#allocation18 + $0x48] sm:$0xff]
    %v1060 = vld [vmem:[#allocation18 + $0x50] sm:$0xff]
    %v1061 = vld [vmem:[#allocation18 + $0x58] sm:$0xff]
    %v1062 = vld [vmem:[#allocation18 + $0x60] sm:$0xff]
    %v1063 = vld [vmem:[#allocation18 + $0x68] sm:$0xff]
    %v1064 = vld [vmem:[#allocation18 + $0x70] sm:$0xff]
    %v1065 = vld [vmem:[#allocation18 + $0x78] sm:$0xff]
    %1066 = vmatpush.msra.mxu0 %v1065
    %1067 = vmatpush.msra.mxu0 %v1064
    %1068 = vmatpush.msra.mxu0 %v1063
    %1069 = vmatpush.msra.mxu0 %v1062
    %1070 = vmatpush.msra.mxu0 %v1061
    %1071 = vmatpush.msra.mxu0 %v1060
    %1072 = vmatpush.msra.mxu0 %v1059
    %1073 = vmatpush.msra.mxu0 %v1058
    %1074 = vmatpush.msra.mxu0 %v1057
    %1075 = vmatpush.msra.mxu0 %v1056
    %1076 = vmatpush.msra.mxu0 %v1055
    %1077 = vmatpush.msra.mxu0 %v1054
    %1078 = vmatpush.msra.mxu0 %v1053
    %1079 = vmatpush.msra.mxu0 %v1052
    %1080 = vmatpush.msra.mxu0 %v1051
    %1081 = vmatpush.msra.mxu0 %v1050
    %1082 = vmatmul.f32.gmra.mxu0 %v1004
    %v1083 = vpop.f32.mrf.mxu0
    %v1084 = vadd.f32 %v1024, %v1083
    %1085 = vmatmul.f32.gmra.mxu0 %v1005
    %v1086 = vpop.f32.mrf.mxu0
    %v1087 = vadd.f32 %v1024, %v1086
    %1088 = vdwg.mxu0
    %v1089 = vmul.f32 %v1084, 0.5
    %v1090 = vmul.f32 %v1087, 0.5
    %v1091 = vtanh.pop %v1089
    %v1092 = vtanh.pop %v1090
    %v1093 = vadd.f32 %v1091, 1.0
    %v1094 = vadd.f32 %v1092, 1.0
    %v1095 = vmul.f32 %v1093, 0.5
    %v1096 = vmul.f32 %v1094, 0.5
    %1097 = vst [vmem:[#allocation28] sm:$0xff] %v1095
    %1098 = vst [vmem:[#allocation30] sm:$0xff] %v1096
    // Predicated region
    $region90: #{tpu_custom_call.1} parent=1 // pred_check
      _
    $region91: #{tpu_custom_call.1} parent=1 // pred_check_branch
      %1100 = sbr.rel (0) target = $region93
    $region92: #{tpu_custom_call.1} parent=1 // pred_region
      %1102 = vsyncadd [#allocation5], 0
      %s1104 = sshll.u32 [#allocation21], 4
      %s1105 = int_to_ptr.vmem [resolvable:$true] %s1104
      %s1106 = sshll.u32 %s11, 4
      %s1107 = int_to_ptr.hbm [resolvable:$true] %s1106
      %1109 = dma.vmem_to_hbm [thread:$0]  %s1105, 768, %s1107, [#allocation5]
    $region93: #{tpu_custom_call.1} parent=1 // pred_fallthru
      _
    // Predicated region
    $region94: #{tpu_custom_call.1} parent=1 // pred_check
      _
    $region95: #{tpu_custom_call.1} parent=1 // pred_check_branch
      %1111 = sbr.rel (0) target = $region97
    $region96: #{tpu_custom_call.1} parent=1 // pred_region
      %1113 = vsyncadd [#allocation23], 0
      %s1115 = sshll.u32 [#allocation22], 4
      %s1116 = int_to_ptr.vmem [resolvable:$true] %s1115
      %s1117 = sshll.u32 %s12, 4
      %s1118 = int_to_ptr.hbm [resolvable:$true] %s1117
      %1120 = dma.vmem_to_hbm [thread:$0]  %s1116, 256, %s1118, [#allocation23]
    $region97: #{tpu_custom_call.1} parent=1 // pred_fallthru
      _
    // Predicated region
    $region98: #{tpu_custom_call.1} parent=1 // pred_check
      _
    $region99: #{tpu_custom_call.1} parent=1 // pred_check_branch
      %1122 = sbr.rel (0) target = $region101
    $region100: #{tpu_custom_call.1} parent=1 // pred_region
      %1124 = vsyncadd [#allocation23], 0
      %s1126 = sshll.u32 [#allocation24], 4
      %s1127 = int_to_ptr.vmem [resolvable:$true] %s1126
      %s1128 = sshll.u32 %s13, 4
      %s1129 = int_to_ptr.hbm [resolvable:$true] %s1128
      %1131 = dma.vmem_to_hbm [thread:$0]  %s1127, 128, %s1129, [#allocation23]
    $region101: #{tpu_custom_call.1} parent=1 // pred_fallthru
      _
    // Predicated region
    $region102: #{tpu_custom_call.1} parent=1 // pred_check
      _
    $region103: #{tpu_custom_call.1} parent=1 // pred_check_branch
      %1133 = sbr.rel (0) target = $region105
    $region104: #{tpu_custom_call.1} parent=1 // pred_region
      %1135 = vsyncadd [#allocation26], 0
      %s1137 = sshll.u32 [#allocation25], 4
      %s1138 = int_to_ptr.vmem [resolvable:$true] %s1137
      %s1139 = sshll.u32 %s14, 4
      %s1140 = int_to_ptr.hbm [resolvable:$true] %s1139
      %1142 = dma.vmem_to_hbm [thread:$0]  %s1138, 128, %s1140, [#allocation26]
    $region105: #{tpu_custom_call.1} parent=1 // pred_fallthru
      _
    // Predicated region
    $region106: #{tpu_custom_call.1} parent=1 // pred_check
      _
    $region107: #{tpu_custom_call.1} parent=1 // pred_check_branch
      %1144 = sbr.rel (0) target = $region109
    $region108: #{tpu_custom_call.1} parent=1 // pred_region
      %1146 = vsyncadd [#allocation26], 0
      %s1148 = sshll.u32 [#allocation27], 4
      %s1149 = int_to_ptr.vmem [resolvable:$true] %s1148
      %s1150 = sshll.u32 %s15, 4
      %s1151 = int_to_ptr.hbm [resolvable:$true] %s1150
      %1153 = dma.vmem_to_hbm [thread:$0]  %s1149, 128, %s1151, [#allocation26]
    $region109: #{tpu_custom_call.1} parent=1 // pred_fallthru
      _
    // Predicated region
    $region110: #{tpu_custom_call.1} parent=1 // pred_check
      _
    $region111: #{tpu_custom_call.1} parent=1 // pred_check_branch
      %1155 = sbr.rel (0) target = $region113
    $region112: #{tpu_custom_call.1} parent=1 // pred_region
      %1157 = vsyncadd [#allocation29], 0
      %s1159 = sshll.u32 [#allocation28], 4
      %s1160 = int_to_ptr.vmem [resolvable:$true] %s1159
      %s1161 = sshll.u32 %s16, 4
      %s1162 = int_to_ptr.hbm [resolvable:$true] %s1161
      %1164 = dma.vmem_to_hbm [thread:$0]  %s1160, 128, %s1162, [#allocation29]
    $region113: #{tpu_custom_call.1} parent=1 // pred_fallthru
      _
    // Predicated region
    $region114: #{tpu_custom_call.1} parent=1 // pred_check
      _
    $region115: #{tpu_custom_call.1} parent=1 // pred_check_branch
      %1166 = sbr.rel (0) target = $region117
    $region116: #{tpu_custom_call.1} parent=1 // pred_region
      %1168 = vsyncadd [#allocation29], 0
      %s1170 = sshll.u32 [#allocation30], 4
      %s1171 = int_to_ptr.vmem [resolvable:$true] %s1170
      %s1172 = sshll.u32 %s17, 4
      %s1173 = int_to_ptr.hbm [resolvable:$true] %s1172
      %1175 = dma.vmem_to_hbm [thread:$0]  %s1171, 128, %s1173, [#allocation29]
    $region117: #{tpu_custom_call.1} parent=1 // pred_fallthru
      _
    // Predicated region
    $region118: #{tpu_custom_call.1} parent=1 // pred_check
      _
    $region119: #{tpu_custom_call.1} parent=1 // pred_check_branch
      %1177 = sbr.rel (0) target = $region121
    $region120: #{tpu_custom_call.1} parent=1 // pred_region
      %1179 = dma.done [#allocation5], 768
    $region121: #{tpu_custom_call.1} parent=1 // pred_fallthru
      _
    // Predicated region
    $region122: #{tpu_custom_call.1} parent=1 // pred_check
      _
    $region123: #{tpu_custom_call.1} parent=1 // pred_check_branch
      %1181 = sbr.rel (0) target = $region125
    $region124: #{tpu_custom_call.1} parent=1 // pred_region
      %1183 = dma.done [#allocation23], 256
    $region125: #{tpu_custom_call.1} parent=1 // pred_fallthru
      _
    // Predicated region
    $region126: #{tpu_custom_call.1} parent=1 // pred_check
      _
    $region127: #{tpu_custom_call.1} parent=1 // pred_check_branch
      %1185 = sbr.rel (0) target = $region129
    $region128: #{tpu_custom_call.1} parent=1 // pred_region
      %1187 = dma.done [#allocation23], 128
    $region129: #{tpu_custom_call.1} parent=1 // pred_fallthru
      _
    // Predicated region
    $region130: #{tpu_custom_call.1} parent=1 // pred_check
      _
    $region131: #{tpu_custom_call.1} parent=1 // pred_check_branch
      %1189 = sbr.rel (0) target = $region133
    $region132: #{tpu_custom_call.1} parent=1 // pred_region
      %1191 = dma.done [#allocation26], 128
    $region133: #{tpu_custom_call.1} parent=1 // pred_fallthru
      _
    // Predicated region
    $region134: #{tpu_custom_call.1} parent=1 // pred_check
      _
    $region135: #{tpu_custom_call.1} parent=1 // pred_check_branch
      %1193 = sbr.rel (0) target = $region137
    $region136: #{tpu_custom_call.1} parent=1 // pred_region
      %1195 = dma.done [#allocation26], 128
    $region137: #{tpu_custom_call.1} parent=1 // pred_fallthru
      _
    // Predicated region
    $region138: #{tpu_custom_call.1} parent=1 // pred_check
      _
    $region139: #{tpu_custom_call.1} parent=1 // pred_check_branch
      %1197 = sbr.rel (0) target = $region141
    $region140: #{tpu_custom_call.1} parent=1 // pred_region
      %1199 = dma.done [#allocation29], 128
    $region141: #{tpu_custom_call.1} parent=1 // pred_fallthru
      _
    // Predicated region
    $region142: #{tpu_custom_call.1} parent=1 // pred_check
      _
    $region143: #{tpu_custom_call.1} parent=1 // pred_check_branch
      %1201 = sbr.rel (0) target = $region145
    $region144: #{tpu_custom_call.1} parent=1 // pred_region
      %1203 = dma.done [#allocation29], 128
    $region145: #{tpu_custom_call.1} parent=1 // pred_fallthru
      _
    %1204 = vsyncpa [#allocation4], 1
    %1205 = vsyncpa [#allocation7], 1
    %1206 = vsyncpa [#allocation10], 1
    %1207 = vsyncpa [#allocation13], 1
    %1208 = vsyncpa [#allocation16], 1
    %1209 = vsyncpa [#allocation19], 1
    %1210 = vsyncpa [#allocation5], 1
    %1211 = vsyncpa [#allocation23], 1
    %1212 = vsyncpa [#allocation26], 1
    %1213 = vsyncpa [#allocation29], 1

</llo_original>
